<compile_context>
chip_gen: v6e
topology: v6e:2x2x1
jax: 0.10.0
libtpu: 0.0.40
codegen_flags: <defaults>
</compile_context>

<pallas_src>
import functools
import jax
import jax.numpy as jnp
from jax.experimental import pallas as pl
from jax.experimental.pallas import tpu as pltpu


def _hswish(v):
    return v * jnp.clip(v + 3.0, 0.0, 6.0) * (1.0 / 6.0)


# --------------------------- fused Pallas kernel -----------------------------

def _inverted_residual_kernel(
    x_ref,      # (R, W*Cin)      lane-dense input slab, R = N*H
    w1b_ref,    # (W*Cin, W*Ch)   block-diag conv1 weight (bn1 scale folded)
    t1_ref,     # (1, W*Ch)       bn1 shift, lane-tiled
    w2_ref,     # (9, W*Ch)       depthwise taps (bn2 scale folded), lane-tiled
    t2_ref,     # (1, W*Ch)       bn2 shift, lane-tiled
    sup_ref,    # (R, R)          row-shift matrix (dy = -1), sample-border aware
    sdn_ref,    # (R, R)          row-shift matrix (dy = +1)
    pool_ref,   # (N, R)          per-sample mean-pool matrix (1/(H*W) blocks)
    selp_ref,   # (W*Ch, Ch)      lane -> channel pooling selector
    wsq_ref,    # (Ch, Cr)        SE squeeze weight
    bsq_ref,    # (1, Cr)
    wex_ref,    # (Cr, Ch)        SE excite weight
    bex_ref,    # (1, Ch)
    selb_ref,   # (Ch, W*Ch)      channel -> lane broadcast selector
    rowb_ref,   # (R, N)          sample -> row broadcast matrix
    w3b_ref,    # (W*Ch, W*oup)   block-diag conv3 weight (bn3 scale folded)
    t3_ref,     # (1, W*oup)      bn3 shift, lane-tiled
    out_ref,    # (R, W*oup)      lane-dense output slab
    cbuf_ref,   # VMEM (R, lpad + W*Ch + Ch) lane-guarded plane for column taps
    *, W, Ch, lpad, use_res,
):
    f32 = jnp.float32
    WC = W * Ch
    R = x_ref.shape[0]

    # ---- 1x1 expand conv (+ folded BN1) + HSwish, stays lane-dense ----------
    plane = _hswish(
        jnp.dot(x_ref[...], w1b_ref[...], preferred_element_type=f32) + t1_ref[...])

    # ---- zero only the two Ch-wide lane guards; interior is overwritten -----
    zpad = jnp.zeros((R, Ch), f32)
    cbuf_ref[:, lpad - Ch:lpad] = zpad                 # left guard
    cbuf_ref[:, lpad + WC:lpad + WC + Ch] = zpad       # right guard
    cbuf_ref[:, lpad:lpad + WC] = plane                # 128-lane aligned store

    # ---- 3x3 depthwise conv (+ folded BN2) + HSwish: one fused expression ---
    # column (+-1 pixel) taps = static lane windows of the guarded buffer,
    # row (+-1 pixel) taps = tiny shift-matrix matmuls on the idle MXU.
    w2 = w2_ref[...]
    col = (
        cbuf_ref[:, lpad - Ch:lpad - Ch + WC],   # kx = 0 : reads pixel w-1
        plane,                                   # kx = 1 : centre
        cbuf_ref[:, lpad + Ch:lpad + Ch + WC],   # kx = 2 : reads pixel w+1
    )

    def tap_w(ky, kx):
        t = 3 * ky + kx
        return w2[t:t + 1, :]                    # (1, W*Ch)

    inner = [
        col[0] * tap_w(ky, 0) + col[1] * tap_w(ky, 1) + col[2] * tap_w(ky, 2)
        for ky in range(3)
    ]
    acc = (jnp.dot(sup_ref[...], inner[0], preferred_element_type=f32)   # dy = -1
           + inner[1]                                                    # dy =  0
           + jnp.dot(sdn_ref[...], inner[2], preferred_element_type=f32)  # dy = +1
           + t2_ref[...])
    y = _hswish(acc)

    # ---- SqueezeExcite: global average pool on the MXU ----------------------
    pooled = jnp.dot(jnp.dot(pool_ref[...], y, preferred_element_type=f32),
                     selp_ref[...], preferred_element_type=f32)          # (N, Ch)
    s = jnp.maximum(
        jnp.dot(pooled, wsq_ref[...], preferred_element_type=f32) + bsq_ref[...], 0.0)
    e = jnp.dot(s, wex_ref[...], preferred_element_type=f32) + bex_ref[...]
    gate = jnp.clip(e + 3.0, 0.0, 6.0) * (1.0 / 6.0)                     # (N, Ch)
    gate_plane = jnp.dot(
        rowb_ref[...],
        jnp.dot(gate, selb_ref[...], preferred_element_type=f32),
        preferred_element_type=f32)                                      # (R, W*Ch)

    # ---- 1x1 project conv (+ folded BN3) + residual, one lane-dense store ---
    z = jnp.dot(y * gate_plane, w3b_ref[...], preferred_element_type=f32) + t3_ref[...]
    if use_res:
        z = z + x_ref[...]
    out_ref[...] = z


# --------------------------- module wrapper ----------------------------------

def fold_bn(gamma, beta, rmean, rvar, eps=1e-5):
    scale = gamma / jnp.sqrt(rvar + eps)
    return scale, beta - rmean * scale


def inverted_residual_forward(x_nchw, params, use_res_connect=True):
    f32 = jnp.float32
    x = jnp.transpose(x_nchw, (0, 2, 3, 1)).astype(f32)        # NCHW -> NHWC
    N, H, W, Cin = x.shape
    Ch = params["w1"].shape[1]
    oup = params["w3"].shape[1]
    K = params["w2"].shape[0]
    assert K == 3, "kernel implements the 3x3 depthwise case"
    if use_res_connect:
        assert Cin == oup
    R = N * H
    WC = W * Ch
    lpad = ((Ch + 127) // 128) * 128      # aligned left offset of the plane store

    # ---- lane-dense input slab (cheap XLA glue) ------------------------------
    x_ld = x.reshape(R, W * Cin)

    # ---- fold BN scales into conv weights; lane-dense (block-diagonal) forms -
    eyeW = jnp.eye(W, dtype=f32)
    lane_tile = lambda v: jnp.tile(jnp.asarray(v, f32).reshape(1, -1), (1, W))
    vec = lambda v: jnp.asarray(v, f32).reshape(1, -1)

    w1b = jnp.kron(eyeW, (params["w1"] * params["s1"][None, :]).astype(f32))
    w3b = jnp.kron(eyeW, (params["w3"] * params["s3"][None, :]).astype(f32))
    w2l = jnp.tile((params["w2"] * params["s2"]).reshape(K * K, Ch).astype(f32), (1, W))
    t1l, t2l, t3l = lane_tile(params["t1"]), lane_tile(params["t2"]), lane_tile(params["t3"])

    # ---- row-shift matrices (+-1 row taps, per-sample borders zeroed) --------
    ridx = jnp.arange(R)
    h_of = ridx % H
    s_up = jnp.eye(R, k=-1, dtype=f32) * (h_of != 0).astype(f32)[:, None]
    s_dn = jnp.eye(R, k=1, dtype=f32) * (h_of != H - 1).astype(f32)[:, None]

    # ---- SE pooling / broadcast helper matrices (all MXU work) ---------------
    samp = ridx // H
    pool_mat = (samp[None, :] == jnp.arange(N)[:, None]).astype(f32) / float(H * W)
    rows_b = (samp[:, None] == jnp.arange(N)[None, :]).astype(f32)
    selp = jnp.tile(jnp.eye(Ch, dtype=f32), (W, 1))            # (W*Ch, Ch)
    selb = jnp.tile(jnp.eye(Ch, dtype=f32), (1, W))            # (Ch, W*Ch)

    kernel = functools.partial(
        _inverted_residual_kernel, W=W, Ch=Ch, lpad=lpad, use_res=use_res_connect)

    args = (x_ld, w1b, t1l, w2l, t2l, s_up, s_dn, pool_mat, selp,
            params["wsq"].astype(f32), vec(params["bsq"]),
            params["wex"].astype(f32), vec(params["bex"]),
            selb, rows_b, w3b, t3l)

    def _full(a):
        nd = a.ndim
        return pl.BlockSpec(a.shape, lambda i, _n=nd: (0,) * _n)

    out_ld = pl.pallas_call(
        kernel,
        out_shape=jax.ShapeDtypeStruct((R, W * oup), f32),
        grid=(1,),
        in_specs=[_full(a) for a in args],
        out_specs=pl.BlockSpec((R, W * oup), lambda i: (0, 0)),
        scratch_shapes=[pltpu.VMEM((R, lpad + WC + Ch), f32)],
    )(*args)

    out = out_ld.reshape(N, H, W, oup)
    return jnp.transpose(out, (0, 3, 1, 2))                    # back to NCHW


# --------------------------- pure-JAX reference ------------------------------

def reference_forward(x_nchw, p):
    x = jnp.transpose(x_nchw, (0, 2, 3, 1)).astype(jnp.float32)
    N, H, W, _ = x.shape
    hswish = lambda v: v * jnp.clip(v + 3.0, 0.0, 6.0) / 6.0
    y = jnp.einsum("nhwc,cd->nhwd", x, p["w1"]) * p["s1"] + p["t1"]
    y = hswish(y)
    yp = jnp.pad(y, ((0, 0), (1, 1), (1, 1), (0, 0)))
    acc = jnp.zeros_like(y)
    for ky in range(3):
        for kx in range(3):
            acc = acc + yp[:, ky:ky + H, kx:kx + W, :] * p["w2"][ky, kx]
    y = hswish(acc * p["s2"] + p["t2"])
    pooled = jnp.mean(y, axis=(1, 2))
    s = jnp.maximum(pooled @ p["wsq"] + p["bsq"], 0.0)
    gate = jnp.clip(s @ p["wex"] + p["bex"] + 3.0, 0.0, 6.0) / 6.0
    y = y * gate[:, None, None, :]
    z = jnp.einsum("nhwc,cd->nhwd", y, p["w3"]) * p["s3"] + p["t3"]
    z = x + z
    return jnp.transpose(z, (0, 3, 1, 2))


# --------------------------------- main ---------------------------------------

if __name__ == "__main__":
    # module hyper-params
    inp, oup, kernel_size, stride, expand_ratio = 8, 8, 3, 1, 2
    hidden = round(inp * expand_ratio)          # 16
    reduction = 4
    N, H, W = 2, 16, 16

    key = jax.random.PRNGKey(0)
    ks = jax.random.split(key, 20)
    norm = lambda k, shape, s=0.3: (jax.random.normal(k, shape) * s).astype(jnp.float32)
    pos = lambda k, shape: (jax.random.uniform(k, shape, minval=0.5, maxval=1.5)
                            ).astype(jnp.float32)

    # deterministic synthetic parameters (channel-last conv weight layouts)
    w1 = norm(ks[0], (inp, hidden))                       # conv1: 1x1, (Cin, Cout)
    s1, t1 = fold_bn(pos(ks[1], (hidden,)), norm(ks[2], (hidden,)),
                     norm(ks[3], (hidden,), 0.1), pos(ks[4], (hidden,)))
    w2 = norm(ks[5], (kernel_size, kernel_size, hidden))  # depthwise: (K, K, C)
    s2, t2 = fold_bn(pos(ks[6], (hidden,)), norm(ks[7], (hidden,)),
                     norm(ks[8], (hidden,), 0.1), pos(ks[9], (hidden,)))
    wsq = norm(ks[10], (hidden, hidden // reduction))
    bsq = norm(ks[11], (hidden // reduction,), 0.1)
    wex = norm(ks[12], (hidden // reduction, hidden))
    bex = norm(ks[13], (hidden,), 0.1)
    w3 = norm(ks[14], (hidden, oup))                      # conv3: 1x1, (Cin, Cout)
    s3, t3 = fold_bn(pos(ks[15], (oup,)), norm(ks[16], (oup,)),
                     norm(ks[17], (oup,), 0.1), pos(ks[18], (oup,)))

    params = dict(w1=w1, s1=s1, t1=t1, w2=w2, s2=s2, t2=t2,
                  wsq=wsq, bsq=bsq, wex=wex, bex=bex, w3=w3, s3=s3, t3=t3)

    # input in PyTorch NCHW convention
    x = jax.random.normal(ks[19], (N, inp, H, W), dtype=jnp.float32)

    out = inverted_residual_forward(x, params, use_res_connect=True)
    out = jax.block_until_ready(out)

    ref = jax.block_until_ready(reference_forward(x, params))
    assert out.shape == (N, oup, H, W)
    assert jnp.allclose(out, ref, rtol=1e-4, atol=1e-4), float(jnp.max(jnp.abs(out - ref)))

    print("KERNEL_OK")
</pallas_src>

<mosaic_0001>
module attributes {stable_mosaic.version = 11 : i64} {
  func.func @_inverted_residual_kernel(%arg0: i32, %arg1: memref<32x128xf32, #tpu.memory_space<vmem>>, %arg2: memref<128x256xf32, #tpu.memory_space<vmem>>, %arg3: memref<1x256xf32, #tpu.memory_space<vmem>>, %arg4: memref<9x256xf32, #tpu.memory_space<vmem>>, %arg5: memref<1x256xf32, #tpu.memory_space<vmem>>, %arg6: memref<32x32xf32, #tpu.memory_space<vmem>>, %arg7: memref<32x32xf32, #tpu.memory_space<vmem>>, %arg8: memref<2x32xf32, #tpu.memory_space<vmem>>, %arg9: memref<256x16xf32, #tpu.memory_space<vmem>>, %arg10: memref<16x4xf32, #tpu.memory_space<vmem>>, %arg11: memref<1x4xf32, #tpu.memory_space<vmem>>, %arg12: memref<4x16xf32, #tpu.memory_space<vmem>>, %arg13: memref<1x16xf32, #tpu.memory_space<vmem>>, %arg14: memref<16x256xf32, #tpu.memory_space<vmem>>, %arg15: memref<32x2xf32, #tpu.memory_space<vmem>>, %arg16: memref<256x128xf32, #tpu.memory_space<vmem>>, %arg17: memref<1x128xf32, #tpu.memory_space<vmem>>, %arg18: memref<32x128xf32, #tpu.memory_space<vmem>>, %arg19: memref<32x400xf32, #tpu.memory_space<vmem>>) attributes {dimension_semantics = [#tpu.dimension_semantics<arbitrary>], iteration_bounds = array<i64: 1>, scalar_prefetch = 0 : i64, scratch_operands = 1 : i64, tpu.core_type = #tpu.core_type<tc>, window_params = [{pipeline_mode = #tpu.pipeline_mode<synchronous>, transform_indices = @transform_0, window_bounds = array<i64: 32, 128>}, {pipeline_mode = #tpu.pipeline_mode<synchronous>, transform_indices = @transform_1, window_bounds = array<i64: 128, 256>}, {pipeline_mode = #tpu.pipeline_mode<synchronous>, transform_indices = @transform_2, window_bounds = array<i64: 1, 256>}, {pipeline_mode = #tpu.pipeline_mode<synchronous>, transform_indices = @transform_3, window_bounds = array<i64: 9, 256>}, {pipeline_mode = #tpu.pipeline_mode<synchronous>, transform_indices = @transform_4, window_bounds = array<i64: 1, 256>}, {pipeline_mode = #tpu.pipeline_mode<synchronous>, transform_indices = @transform_5, window_bounds = array<i64: 32, 32>}, {pipeline_mode = #tpu.pipeline_mode<synchronous>, transform_indices = @transform_6, window_bounds = array<i64: 32, 32>}, {pipeline_mode = #tpu.pipeline_mode<synchronous>, transform_indices = @transform_7, window_bounds = array<i64: 2, 32>}, {pipeline_mode = #tpu.pipeline_mode<synchronous>, transform_indices = @transform_8, window_bounds = array<i64: 256, 16>}, {pipeline_mode = #tpu.pipeline_mode<synchronous>, transform_indices = @transform_9, window_bounds = array<i64: 16, 4>}, {pipeline_mode = #tpu.pipeline_mode<synchronous>, transform_indices = @transform_10, window_bounds = array<i64: 1, 4>}, {pipeline_mode = #tpu.pipeline_mode<synchronous>, transform_indices = @transform_11, window_bounds = array<i64: 4, 16>}, {pipeline_mode = #tpu.pipeline_mode<synchronous>, transform_indices = @transform_12, window_bounds = array<i64: 1, 16>}, {pipeline_mode = #tpu.pipeline_mode<synchronous>, transform_indices = @transform_13, window_bounds = array<i64: 16, 256>}, {pipeline_mode = #tpu.pipeline_mode<synchronous>, transform_indices = @transform_14, window_bounds = array<i64: 32, 2>}, {pipeline_mode = #tpu.pipeline_mode<synchronous>, transform_indices = @transform_15, window_bounds = array<i64: 256, 128>}, {pipeline_mode = #tpu.pipeline_mode<synchronous>, transform_indices = @transform_16, window_bounds = array<i64: 1, 128>}, {pipeline_mode = #tpu.pipeline_mode<synchronous>, transform_indices = @transform_17, window_bounds = array<i64: 32, 128>}]} {
    %c0 = arith.constant 0 : index
    %c0_0 = arith.constant 0 : index
    %0 = vector.load %arg1[%c0, %c0_0] : memref<32x128xf32, #tpu.memory_space<vmem>>, vector<32x128xf32>
    %c0_1 = arith.constant 0 : index
    %c0_2 = arith.constant 0 : index
    %1 = vector.load %arg2[%c0_1, %c0_2] : memref<128x256xf32, #tpu.memory_space<vmem>>, vector<128x256xf32>
    %cst = arith.constant dense<0.000000e+00> : vector<32x256xf32>
    %2 = tpu.matmul %0, %1, %cst {dimension_numbers = #tpu.dot_dimension_numbers<[1], [0], [0], [1], [0, 0, 1, 1], [], []>} : vector<32x128xf32>, vector<128x256xf32>, vector<32x256xf32> -> vector<32x256xf32>
    %c0_3 = arith.constant 0 : index
    %c0_4 = arith.constant 0 : index
    %3 = vector.load %arg3[%c0_3, %c0_4] : memref<1x256xf32, #tpu.memory_space<vmem>>, vector<1x256xf32>
    %4 = vector.broadcast %3 : vector<1x256xf32> to vector<32x256xf32>
    %5 = arith.addf %2, %4 : vector<32x256xf32>
    %cst_5 = arith.constant 3.000000e+00 : f32
    %6 = vector.broadcast %cst_5 : f32 to vector<32x256xf32>
    %7 = arith.addf %5, %6 : vector<32x256xf32>
    %cst_6 = arith.constant 0.000000e+00 : f32
    %cst_7 = arith.constant 6.000000e+00 : f32
    %8 = vector.broadcast %cst_6 : f32 to vector<32x256xf32>
    %9 = arith.maximumf %8, %7 : vector<32x256xf32>
    %10 = vector.broadcast %cst_7 : f32 to vector<32x256xf32>
    %11 = arith.minimumf %10, %9 : vector<32x256xf32>
    %12 = arith.mulf %5, %11 : vector<32x256xf32>
    %cst_8 = arith.constant 0.166666672 : f32
    %13 = vector.broadcast %cst_8 : f32 to vector<32x256xf32>
    %14 = arith.mulf %12, %13 : vector<32x256xf32>
    %cst_9 = arith.constant 0.000000e+00 : f32
    %15 = vector.broadcast %cst_9 : f32 to vector<32x16xf32>
    %c0_10 = arith.constant 0 : index
    %c112 = arith.constant 112 : index
    %16 = vector.load %arg19[%c0_10, %c112] : memref<32x400xf32, #tpu.memory_space<vmem>>, vector<32x16xf32>
    tpu.vector_store %arg19[%c0_10, %c112], %15 {strides = array<i32>} : memref<32x400xf32, #tpu.memory_space<vmem>>, vector<32x16xf32>,
    %c0_11 = arith.constant 0 : index
    %c384 = arith.constant 384 : index
    %17 = vector.load %arg19[%c0_11, %c384] : memref<32x400xf32, #tpu.memory_space<vmem>>, vector<32x16xf32>
    tpu.vector_store %arg19[%c0_11, %c384], %15 {strides = array<i32>} : memref<32x400xf32, #tpu.memory_space<vmem>>, vector<32x16xf32>,
    %c0_12 = arith.constant 0 : index
    %c128 = arith.constant 128 : index
    %18 = vector.load %arg19[%c0_12, %c128] : memref<32x400xf32, #tpu.memory_space<vmem>>, vector<32x256xf32>
    tpu.vector_store %arg19[%c0_12, %c128], %14 {strides = array<i32>} : memref<32x400xf32, #tpu.memory_space<vmem>>, vector<32x256xf32>,
    %c0_13 = arith.constant 0 : index
    %c0_14 = arith.constant 0 : index
    %19 = vector.load %arg4[%c0_13, %c0_14] : memref<9x256xf32, #tpu.memory_space<vmem>>, vector<9x256xf32>
    %c0_15 = arith.constant 0 : index
    %c112_16 = arith.constant 112 : index
    %20 = vector.load %arg19[%c0_15, %c112_16] : memref<32x400xf32, #tpu.memory_space<vmem>>, vector<32x256xf32>
    %c0_17 = arith.constant 0 : index
    %c144 = arith.constant 144 : index
    %21 = vector.load %arg19[%c0_17, %c144] : memref<32x400xf32, #tpu.memory_space<vmem>>, vector<32x256xf32>
    %22 = vector.extract_strided_slice %19 {offsets = [0, 0], sizes = [1, 256], strides = [1, 1]} : vector<9x256xf32> to vector<1x256xf32>
    %23 = vector.broadcast %22 : vector<1x256xf32> to vector<32x256xf32>
    %24 = arith.mulf %20, %23 : vector<32x256xf32>
    %25 = vector.extract_strided_slice %19 {offsets = [1, 0], sizes = [1, 256], strides = [1, 1]} : vector<9x256xf32> to vector<1x256xf32>
    %26 = vector.broadcast %25 : vector<1x256xf32> to vector<32x256xf32>
    %27 = arith.mulf %14, %26 : vector<32x256xf32>
    %28 = arith.addf %24, %27 : vector<32x256xf32>
    %29 = vector.extract_strided_slice %19 {offsets = [2, 0], sizes = [1, 256], strides = [1, 1]} : vector<9x256xf32> to vector<1x256xf32>
    %30 = vector.broadcast %29 : vector<1x256xf32> to vector<32x256xf32>
    %31 = arith.mulf %21, %30 : vector<32x256xf32>
    %32 = arith.addf %28, %31 : vector<32x256xf32>
    %33 = vector.extract_strided_slice %19 {offsets = [3, 0], sizes = [1, 256], strides = [1, 1]} : vector<9x256xf32> to vector<1x256xf32>
    %34 = vector.broadcast %33 : vector<1x256xf32> to vector<32x256xf32>
    %35 = arith.mulf %20, %34 : vector<32x256xf32>
    %36 = vector.extract_strided_slice %19 {offsets = [4, 0], sizes = [1, 256], strides = [1, 1]} : vector<9x256xf32> to vector<1x256xf32>
    %37 = vector.broadcast %36 : vector<1x256xf32> to vector<32x256xf32>
    %38 = arith.mulf %14, %37 : vector<32x256xf32>
    %39 = arith.addf %35, %38 : vector<32x256xf32>
    %40 = vector.extract_strided_slice %19 {offsets = [5, 0], sizes = [1, 256], strides = [1, 1]} : vector<9x256xf32> to vector<1x256xf32>
    %41 = vector.broadcast %40 : vector<1x256xf32> to vector<32x256xf32>
    %42 = arith.mulf %21, %41 : vector<32x256xf32>
    %43 = arith.addf %39, %42 : vector<32x256xf32>
    %44 = vector.extract_strided_slice %19 {offsets = [6, 0], sizes = [1, 256], strides = [1, 1]} : vector<9x256xf32> to vector<1x256xf32>
    %45 = vector.broadcast %44 : vector<1x256xf32> to vector<32x256xf32>
    %46 = arith.mulf %20, %45 : vector<32x256xf32>
    %47 = vector.extract_strided_slice %19 {offsets = [7, 0], sizes = [1, 256], strides = [1, 1]} : vector<9x256xf32> to vector<1x256xf32>
    %48 = vector.broadcast %47 : vector<1x256xf32> to vector<32x256xf32>
    %49 = arith.mulf %14, %48 : vector<32x256xf32>
    %50 = arith.addf %46, %49 : vector<32x256xf32>
    %51 = vector.extract_strided_slice %19 {offsets = [8, 0], sizes = [1, 256], strides = [1, 1]} : vector<9x256xf32> to vector<1x256xf32>
    %52 = vector.broadcast %51 : vector<1x256xf32> to vector<32x256xf32>
    %53 = arith.mulf %21, %52 : vector<32x256xf32>
    %54 = arith.addf %50, %53 : vector<32x256xf32>
    %c0_18 = arith.constant 0 : index
    %c0_19 = arith.constant 0 : index
    %55 = vector.load %arg6[%c0_18, %c0_19] : memref<32x32xf32, #tpu.memory_space<vmem>>, vector<32x32xf32>
    %cst_20 = arith.constant dense<0.000000e+00> : vector<32x256xf32>
    %56 = tpu.matmul %55, %32, %cst_20 {dimension_numbers = #tpu.dot_dimension_numbers<[1], [0], [0], [1], [0, 0, 1, 1], [], []>} : vector<32x32xf32>, vector<32x256xf32>, vector<32x256xf32> -> vector<32x256xf32>
    %57 = arith.addf %56, %43 : vector<32x256xf32>
    %c0_21 = arith.constant 0 : index
    %c0_22 = arith.constant 0 : index
    %58 = vector.load %arg7[%c0_21, %c0_22] : memref<32x32xf32, #tpu.memory_space<vmem>>, vector<32x32xf32>
    %cst_23 = arith.constant dense<0.000000e+00> : vector<32x256xf32>
    %59 = tpu.matmul %58, %54, %cst_23 {dimension_numbers = #tpu.dot_dimension_numbers<[1], [0], [0], [1], [0, 0, 1, 1], [], []>} : vector<32x32xf32>, vector<32x256xf32>, vector<32x256xf32> -> vector<32x256xf32>
    %60 = arith.addf %57, %59 : vector<32x256xf32>
    %c0_24 = arith.constant 0 : index
    %c0_25 = arith.constant 0 : index
    %61 = vector.load %arg5[%c0_24, %c0_25] : memref<1x256xf32, #tpu.memory_space<vmem>>, vector<1x256xf32>
    %62 = vector.broadcast %61 : vector<1x256xf32> to vector<32x256xf32>
    %63 = arith.addf %60, %62 : vector<32x256xf32>
    %cst_26 = arith.constant 3.000000e+00 : f32
    %64 = vector.broadcast %cst_26 : f32 to vector<32x256xf32>
    %65 = arith.addf %63, %64 : vector<32x256xf32>
    %cst_27 = arith.constant 0.000000e+00 : f32
    %cst_28 = arith.constant 6.000000e+00 : f32
    %66 = vector.broadcast %cst_27 : f32 to vector<32x256xf32>
    %67 = arith.maximumf %66, %65 : vector<32x256xf32>
    %68 = vector.broadcast %cst_28 : f32 to vector<32x256xf32>
    %69 = arith.minimumf %68, %67 : vector<32x256xf32>
    %70 = arith.mulf %63, %69 : vector<32x256xf32>
    %cst_29 = arith.constant 0.166666672 : f32
    %71 = vector.broadcast %cst_29 : f32 to vector<32x256xf32>
    %72 = arith.mulf %70, %71 : vector<32x256xf32>
    %c0_30 = arith.constant 0 : index
    %c0_31 = arith.constant 0 : index
    %73 = vector.load %arg8[%c0_30, %c0_31] : memref<2x32xf32, #tpu.memory_space<vmem>>, vector<2x32xf32>
    %cst_32 = arith.constant dense<0.000000e+00> : vector<2x256xf32>
    %74 = tpu.matmul %73, %72, %cst_32 {dimension_numbers = #tpu.dot_dimension_numbers<[1], [0], [0], [1], [0, 0, 1, 1], [], []>} : vector<2x32xf32>, vector<32x256xf32>, vector<2x256xf32> -> vector<2x256xf32>
    %c0_33 = arith.constant 0 : index
    %c0_34 = arith.constant 0 : index
    %75 = vector.load %arg9[%c0_33, %c0_34] : memref<256x16xf32, #tpu.memory_space<vmem>>, vector<256x16xf32>
    %cst_35 = arith.constant dense<0.000000e+00> : vector<2x16xf32>
    %76 = tpu.matmul %74, %75, %cst_35 {dimension_numbers = #tpu.dot_dimension_numbers<[1], [0], [0], [1], [0, 0, 1, 1], [], []>} : vector<2x256xf32>, vector<256x16xf32>, vector<2x16xf32> -> vector<2x16xf32>
    %c0_36 = arith.constant 0 : index
    %c0_37 = arith.constant 0 : index
    %77 = vector.load %arg10[%c0_36, %c0_37] : memref<16x4xf32, #tpu.memory_space<vmem>>, vector<16x4xf32>
    %cst_38 = arith.constant dense<0.000000e+00> : vector<2x4xf32>
    %78 = tpu.matmul %76, %77, %cst_38 {dimension_numbers = #tpu.dot_dimension_numbers<[1], [0], [0], [1], [0, 0, 1, 1], [], []>} : vector<2x16xf32>, vector<16x4xf32>, vector<2x4xf32> -> vector<2x4xf32>
    %c0_39 = arith.constant 0 : index
    %c0_40 = arith.constant 0 : index
    %79 = vector.load %arg11[%c0_39, %c0_40] : memref<1x4xf32, #tpu.memory_space<vmem>>, vector<1x4xf32>
    %80 = vector.broadcast %79 : vector<1x4xf32> to vector<2x4xf32>
    %81 = arith.addf %78, %80 : vector<2x4xf32>
    %cst_41 = arith.constant 0.000000e+00 : f32
    %82 = vector.broadcast %cst_41 : f32 to vector<2x4xf32>
    %83 = arith.maximumf %81, %82 : vector<2x4xf32>
    %c0_42 = arith.constant 0 : index
    %c0_43 = arith.constant 0 : index
    %84 = vector.load %arg12[%c0_42, %c0_43] : memref<4x16xf32, #tpu.memory_space<vmem>>, vector<4x16xf32>
    %cst_44 = arith.constant dense<0.000000e+00> : vector<2x16xf32>
    %85 = tpu.matmul %83, %84, %cst_44 {dimension_numbers = #tpu.dot_dimension_numbers<[1], [0], [0], [1], [0, 0, 1, 1], [], []>} : vector<2x4xf32>, vector<4x16xf32>, vector<2x16xf32> -> vector<2x16xf32>
    %c0_45 = arith.constant 0 : index
    %c0_46 = arith.constant 0 : index
    %86 = vector.load %arg13[%c0_45, %c0_46] : memref<1x16xf32, #tpu.memory_space<vmem>>, vector<1x16xf32>
    %87 = vector.broadcast %86 : vector<1x16xf32> to vector<2x16xf32>
    %88 = arith.addf %85, %87 : vector<2x16xf32>
    %cst_47 = arith.constant 3.000000e+00 : f32
    %89 = vector.broadcast %cst_47 : f32 to vector<2x16xf32>
    %90 = arith.addf %88, %89 : vector<2x16xf32>
    %cst_48 = arith.constant 0.000000e+00 : f32
    %cst_49 = arith.constant 6.000000e+00 : f32
    %91 = vector.broadcast %cst_48 : f32 to vector<2x16xf32>
    %92 = arith.maximumf %91, %90 : vector<2x16xf32>
    %93 = vector.broadcast %cst_49 : f32 to vector<2x16xf32>
    %94 = arith.minimumf %93, %92 : vector<2x16xf32>
    %cst_50 = arith.constant 0.166666672 : f32
    %95 = vector.broadcast %cst_50 : f32 to vector<2x16xf32>
    %96 = arith.mulf %94, %95 : vector<2x16xf32>
    %c0_51 = arith.constant 0 : index
    %c0_52 = arith.constant 0 : index
    %97 = vector.load %arg15[%c0_51, %c0_52] : memref<32x2xf32, #tpu.memory_space<vmem>>, vector<32x2xf32>
    %c0_53 = arith.constant 0 : index
    %c0_54 = arith.constant 0 : index
    %98 = vector.load %arg14[%c0_53, %c0_54] : memref<16x256xf32, #tpu.memory_space<vmem>>, vector<16x256xf32>
    %cst_55 = arith.constant dense<0.000000e+00> : vector<2x256xf32>
    %99 = tpu.matmul %96, %98, %cst_55 {dimension_numbers = #tpu.dot_dimension_numbers<[1], [0], [0], [1], [0, 0, 1, 1], [], []>} : vector<2x16xf32>, vector<16x256xf32>, vector<2x256xf32> -> vector<2x256xf32>
    %cst_56 = arith.constant dense<0.000000e+00> : vector<32x256xf32>
    %100 = tpu.matmul %97, %99, %cst_56 {dimension_numbers = #tpu.dot_dimension_numbers<[1], [0], [0], [1], [0, 0, 1, 1], [], []>} : vector<32x2xf32>, vector<2x256xf32>, vector<32x256xf32> -> vector<32x256xf32>
    %101 = arith.mulf %72, %100 : vector<32x256xf32>
    %c0_57 = arith.constant 0 : index
    %c0_58 = arith.constant 0 : index
    %102 = vector.load %arg16[%c0_57, %c0_58] : memref<256x128xf32, #tpu.memory_space<vmem>>, vector<256x128xf32>
    %cst_59 = arith.constant dense<0.000000e+00> : vector<32x128xf32>
    %103 = tpu.matmul %101, %102, %cst_59 {dimension_numbers = #tpu.dot_dimension_numbers<[1], [0], [0], [1], [0, 0, 1, 1], [], []>} : vector<32x256xf32>, vector<256x128xf32>, vector<32x128xf32> -> vector<32x128xf32>
    %c0_60 = arith.constant 0 : index
    %c0_61 = arith.constant 0 : index
    %104 = vector.load %arg17[%c0_60, %c0_61] : memref<1x128xf32, #tpu.memory_space<vmem>>, vector<1x128xf32>
    %105 = vector.broadcast %104 : vector<1x128xf32> to vector<32x128xf32>
    %106 = arith.addf %103, %105 : vector<32x128xf32>
    %c0_62 = arith.constant 0 : index
    %c0_63 = arith.constant 0 : index
    %107 = vector.load %arg1[%c0_62, %c0_63] : memref<32x128xf32, #tpu.memory_space<vmem>>, vector<32x128xf32>
    %108 = arith.addf %106, %107 : vector<32x128xf32>
    %c0_64 = arith.constant 0 : index
    %c0_65 = arith.constant 0 : index
    %109 = vector.load %arg18[%c0_64, %c0_65] : memref<32x128xf32, #tpu.memory_space<vmem>>, vector<32x128xf32>
    tpu.vector_store %arg18[%c0_64, %c0_65], %108 {strides = array<i32>} : memref<32x128xf32, #tpu.memory_space<vmem>>, vector<32x128xf32>,
    return
  }
  func.func @transform_0(%arg0: i32) -> (i32, i32) {
    %c0_i32 = arith.constant 0 : i32
    %c0_i32_0 = arith.constant 0 : i32
    %c0_i32_1 = arith.constant 0 : i32
    return %c0_i32, %c0_i32_0 : i32, i32
  }
  func.func @transform_1(%arg0: i32) -> (i32, i32) {
    %c0_i32 = arith.constant 0 : i32
    %c0_i32_0 = arith.constant 0 : i32
    %c0_i32_1 = arith.constant 0 : i32
    return %c0_i32, %c0_i32_0 : i32, i32
  }
  func.func @transform_2(%arg0: i32) -> (i32, i32) {
    %c0_i32 = arith.constant 0 : i32
    %c0_i32_0 = arith.constant 0 : i32
    %c0_i32_1 = arith.constant 0 : i32
    return %c0_i32, %c0_i32_0 : i32, i32
  }
  func.func @transform_3(%arg0: i32) -> (i32, i32) {
    %c0_i32 = arith.constant 0 : i32
    %c0_i32_0 = arith.constant 0 : i32
    %c0_i32_1 = arith.constant 0 : i32
    return %c0_i32, %c0_i32_0 : i32, i32
  }
  func.func @transform_4(%arg0: i32) -> (i32, i32) {
    %c0_i32 = arith.constant 0 : i32
    %c0_i32_0 = arith.constant 0 : i32
    %c0_i32_1 = arith.constant 0 : i32
    return %c0_i32, %c0_i32_0 : i32, i32
  }
  func.func @transform_5(%arg0: i32) -> (i32, i32) {
    %c0_i32 = arith.constant 0 : i32
    %c0_i32_0 = arith.constant 0 : i32
    %c0_i32_1 = arith.constant 0 : i32
    return %c0_i32, %c0_i32_0 : i32, i32
  }
  func.func @transform_6(%arg0: i32) -> (i32, i32) {
    %c0_i32 = arith.constant 0 : i32
    %c0_i32_0 = arith.constant 0 : i32
    %c0_i32_1 = arith.constant 0 : i32
    return %c0_i32, %c0_i32_0 : i32, i32
  }
  func.func @transform_7(%arg0: i32) -> (i32, i32) {
    %c0_i32 = arith.constant 0 : i32
    %c0_i32_0 = arith.constant 0 : i32
    %c0_i32_1 = arith.constant 0 : i32
    return %c0_i32, %c0_i32_0 : i32, i32
  }
  func.func @transform_8(%arg0: i32) -> (i32, i32) {
    %c0_i32 = arith.constant 0 : i32
    %c0_i32_0 = arith.constant 0 : i32
    %c0_i32_1 = arith.constant 0 : i32
    return %c0_i32, %c0_i32_0 : i32, i32
  }
  func.func @transform_9(%arg0: i32) -> (i32, i32) {
    %c0_i32 = arith.constant 0 : i32
    %c0_i32_0 = arith.constant 0 : i32
    %c0_i32_1 = arith.constant 0 : i32
    return %c0_i32, %c0_i32_0 : i32, i32
  }
  func.func @transform_10(%arg0: i32) -> (i32, i32) {
    %c0_i32 = arith.constant 0 : i32
    %c0_i32_0 = arith.constant 0 : i32
    %c0_i32_1 = arith.constant 0 : i32
    return %c0_i32, %c0_i32_0 : i32, i32
  }
  func.func @transform_11(%arg0: i32) -> (i32, i32) {
    %c0_i32 = arith.constant 0 : i32
    %c0_i32_0 = arith.constant 0 : i32
    %c0_i32_1 = arith.constant 0 : i32
    return %c0_i32, %c0_i32_0 : i32, i32
  }
  func.func @transform_12(%arg0: i32) -> (i32, i32) {
    %c0_i32 = arith.constant 0 : i32
    %c0_i32_0 = arith.constant 0 : i32
    %c0_i32_1 = arith.constant 0 : i32
    return %c0_i32, %c0_i32_0 : i32, i32
  }
  func.func @transform_13(%arg0: i32) -> (i32, i32) {
    %c0_i32 = arith.constant 0 : i32
    %c0_i32_0 = arith.constant 0 : i32
    %c0_i32_1 = arith.constant 0 : i32
    return %c0_i32, %c0_i32_0 : i32, i32
  }
  func.func @transform_14(%arg0: i32) -> (i32, i32) {
    %c0_i32 = arith.constant 0 : i32
    %c0_i32_0 = arith.constant 0 : i32
    %c0_i32_1 = arith.constant 0 : i32
    return %c0_i32, %c0_i32_0 : i32, i32
  }
  func.func @transform_15(%arg0: i32) -> (i32, i32) {
    %c0_i32 = arith.constant 0 : i32
    %c0_i32_0 = arith.constant 0 : i32
    %c0_i32_1 = arith.constant 0 : i32
    return %c0_i32, %c0_i32_0 : i32, i32
  }
  func.func @transform_16(%arg0: i32) -> (i32, i32) {
    %c0_i32 = arith.constant 0 : i32
    %c0_i32_0 = arith.constant 0 : i32
    %c0_i32_1 = arith.constant 0 : i32
    return %c0_i32, %c0_i32_0 : i32, i32
  }
  func.func @transform_17(%arg0: i32) -> (i32, i32) {
    %c0_i32 = arith.constant 0 : i32
    %c0_i32_0 = arith.constant 0 : i32
    %c0_i32_1 = arith.constant 0 : i32
    return %c0_i32, %c0_i32_0 : i32, i32
  }
}

</mosaic_0001>

<llo_original>
// kernel: tpu_custom_call.1
$region0: #{tpu_custom_call.1}
  #allocation0 [shape = 'u32[]', space=smem, size = 0x4, offset = 0x4, fixed_abs, tag = 'smem constant byte address 0x4 - core index']
  #allocation1 [shape = 'u32[144,128]{1,0:T(1,128)}', space=vmem, size = 0x12000, scoped, tag = 'internal scratch']
  #allocation2 [shape = 'f32[32,400]{1,0:T(8,128)}', space=vmem, size = 0x10000, scoped, tag = 'scratch operand']
  %s0 = inlined_call_operand.vmem [shape: f32[32,128], index: 0, kind: input, shape index: {}]
  %s1 = inlined_call_operand.vmem [shape: f32[128,256], index: 1, kind: input, shape index: {}]
  %s2 = inlined_call_operand.hbm [shape: f32[1,256], index: 2, kind: input, shape index: {}]
  %s3 = inlined_call_operand.hbm [shape: f32[9,256], index: 3, kind: input, shape index: {}]
  %s4 = inlined_call_operand.hbm [shape: f32[1,256], index: 4, kind: input, shape index: {}]
  %s5 = inlined_call_operand.hbm [shape: f32[32,32], index: 5, kind: input, shape index: {}]
  %s6 = inlined_call_operand.vmem [shape: f32[32,32], index: 6, kind: input, shape index: {}]
  %s7 = inlined_call_operand.hbm [shape: f32[2,32], index: 7, kind: input, shape index: {}]
  %s8 = inlined_call_operand.vmem [shape: f32[256,16], index: 8, kind: input, shape index: {}]
  %s9 = inlined_call_operand.vmem [shape: f32[16,4], index: 9, kind: input, shape index: {}]
  %s10 = inlined_call_operand.hbm [shape: f32[1,4], index: 10, kind: input, shape index: {}]
  %s11 = inlined_call_operand.vmem [shape: f32[4,16], index: 11, kind: input, shape index: {}]
  %s12 = inlined_call_operand.vmem [shape: f32[1,16], index: 12, kind: input, shape index: {}]
  %s13 = inlined_call_operand.hbm [shape: f32[16,256], index: 13, kind: input, shape index: {}]
  %s14 = inlined_call_operand.vmem [shape: f32[32,2], index: 14, kind: input, shape index: {}]
  %s15 = inlined_call_operand.hbm [shape: f32[256,128], index: 15, kind: input, shape index: {}]
  %s16 = inlined_call_operand.vmem [shape: f32[1,128], index: 16, kind: input, shape index: {}]
  %s17 = inlined_call_operand.hbm [shape: f32[32,128], index: 17, kind: output, shape index: {}]
  %s18 = sld [smem:[#allocation0]]
  $region110: #{tpu_custom_call.1} parent=0
    _
  %s20 = ssub.s32 1, %s18
  %s21 = scalar_select 0, %s20, %s18
  $region1: #{tpu_custom_call.1} parent=0
    #allocation3 [shape = 'u8[1024]{0}', space=vmem, size = 0x400, scoped, tag = 'input window, operand 2, single buffered']
    #allocation4 [shape = 's32[1]{0}', space=sflag, size = 0x4, scoped, tag = 'scoped memory for tpu_custom_call.1']
    #allocation5 [shape = 's32[1]{0}', space=sflag, size = 0x4, scoped, tag = 'scoped memory for tpu_custom_call.1']
    #allocation6 [shape = 'u8[16384]{0}', space=vmem, size = 0x4000, scoped, tag = 'input window, operand 3, single buffered']
    #allocation7 [shape = 's32[1]{0}', space=sflag, size = 0x4, scoped, tag = 'scoped memory for tpu_custom_call.1']
    #allocation8 [shape = 'u8[1024]{0}', space=vmem, size = 0x400, scoped, tag = 'input window, operand 4, single buffered']
    #allocation9 [shape = 'u8[16384]{0}', space=vmem, size = 0x4000, scoped, tag = 'input window, operand 5, single buffered']
    #allocation10 [shape = 's32[1]{0}', space=sflag, size = 0x4, scoped, tag = 'scoped memory for tpu_custom_call.1']
    #allocation11 [shape = 'u8[1024]{0}', space=vmem, size = 0x400, scoped, tag = 'input window, operand 7, single buffered']
    #allocation12 [shape = 'u8[512]{0}', space=vmem, size = 0x400, scoped, tag = 'input window, operand 10, single buffered']
    #allocation13 [shape = 's32[1]{0}', space=sflag, size = 0x4, scoped, tag = 'scoped memory for tpu_custom_call.1']
    #allocation14 [shape = 'u8[16384]{0}', space=vmem, size = 0x4000, scoped, tag = 'input window, operand 13, single buffered']
    #allocation15 [shape = 'u8[131072]{0}', space=vmem, size = 0x20000, scoped, tag = 'input window, operand 15, single buffered']
    #allocation16 [shape = 's32[1]{0}', space=sflag, size = 0x4, scoped, tag = 'scoped memory for tpu_custom_call.1']
    #allocation17 [shape = 'u8[16384]{0}', space=vmem, size = 0x4000, scoped, tag = 'output window, operand 0, single buffered']
    %22 = vsyncpa [#allocation4], 0
    %23 = vsyncpa [#allocation7], 0
    %24 = vsyncpa [#allocation10], 0
    %25 = vsyncpa [#allocation13], 0
    %26 = vsyncpa [#allocation16], 0
    %27 = vsyncpa [#allocation5], 0
    // Predicated region
    $region2: #{tpu_custom_call.1} parent=1 // pred_check
      _
    $region3: #{tpu_custom_call.1} parent=1 // pred_check_branch
      %29 = sbr.rel (0) target = $region5
    $region4: #{tpu_custom_call.1} parent=1 // pred_region
      _
    $region5: #{tpu_custom_call.1} parent=1 // pred_fallthru
      _
    // Predicated region
    $region6: #{tpu_custom_call.1} parent=1 // pred_check
      _
    $region7: #{tpu_custom_call.1} parent=1 // pred_check_branch
      %31 = sbr.rel (0) target = $region9
    $region8: #{tpu_custom_call.1} parent=1 // pred_region
      _
    $region9: #{tpu_custom_call.1} parent=1 // pred_fallthru
      _
    // Predicated region
    $region10: #{tpu_custom_call.1} parent=1 // pred_check
      _
    $region11: #{tpu_custom_call.1} parent=1 // pred_check_branch
      %33 = sbr.rel (0) target = $region13
    $region12: #{tpu_custom_call.1} parent=1 // pred_region
      %s35 = ssub.s32 32, 32
      %36 = vsyncadd [#allocation4], %s35
      %s38 = sshll.u32 [#allocation3], 4
      %s39 = int_to_ptr.vmem [resolvable:$true] %s38
      %41 = dma.hbm_to_vmem [thread:$0]  %s2, 32, %s39, [#allocation4]
    $region13: #{tpu_custom_call.1} parent=1 // pred_fallthru
      _
    // Predicated region
    $region14: #{tpu_custom_call.1} parent=1 // pred_check
      _
    $region15: #{tpu_custom_call.1} parent=1 // pred_check_branch
      %43 = sbr.rel (0) target = $region17
    $region16: #{tpu_custom_call.1} parent=1 // pred_region
      %s45 = ssub.s32 512, 512
      %46 = vsyncadd [#allocation7], %s45
      %s47 = sshll.u32 [#allocation6], 4
      %s48 = int_to_ptr.vmem [resolvable:$true] %s47
      %53 = dma.hbm_to_vmem [thread:$0]  %s3, 512, %s48, [#allocation7], 256, 256, 16
    $region17: #{tpu_custom_call.1} parent=1 // pred_fallthru
      _
    // Predicated region
    $region18: #{tpu_custom_call.1} parent=1 // pred_check
      _
    $region19: #{tpu_custom_call.1} parent=1 // pred_check_branch
      %55 = sbr.rel (0) target = $region21
    $region20: #{tpu_custom_call.1} parent=1 // pred_region
      %s57 = ssub.s32 32, 32
      %58 = vsyncadd [#allocation7], %s57
      %s60 = sshll.u32 [#allocation8], 4
      %s61 = int_to_ptr.vmem [resolvable:$true] %s60
      %63 = dma.hbm_to_vmem [thread:$0]  %s4, 32, %s61, [#allocation7]
    $region21: #{tpu_custom_call.1} parent=1 // pred_fallthru
      _
    // Predicated region
    $region22: #{tpu_custom_call.1} parent=1 // pred_check
      _
    $region23: #{tpu_custom_call.1} parent=1 // pred_check_branch
      %65 = sbr.rel (0) target = $region25
    $region24: #{tpu_custom_call.1} parent=1 // pred_region
      %s67 = ssub.s32 512, 512
      %68 = vsyncadd [#allocation10], %s67
      %s69 = sshll.u32 [#allocation9], 4
      %s70 = int_to_ptr.vmem [resolvable:$true] %s69
      %75 = dma.hbm_to_vmem [thread:$0]  %s5, 512, %s70, [#allocation10], 128, 128, 8
    $region25: #{tpu_custom_call.1} parent=1 // pred_fallthru
      _
    // Predicated region
    $region26: #{tpu_custom_call.1} parent=1 // pred_check
      _
    $region27: #{tpu_custom_call.1} parent=1 // pred_check_branch
      %77 = sbr.rel (0) target = $region29
    $region28: #{tpu_custom_call.1} parent=1 // pred_region
      _
    $region29: #{tpu_custom_call.1} parent=1 // pred_fallthru
      _
    // Predicated region
    $region30: #{tpu_custom_call.1} parent=1 // pred_check
      _
    $region31: #{tpu_custom_call.1} parent=1 // pred_check_branch
      %79 = sbr.rel (0) target = $region33
    $region32: #{tpu_custom_call.1} parent=1 // pred_region
      %s81 = ssub.s32 32, 32
      %82 = vsyncadd [#allocation10], %s81
      %s84 = sshll.u32 [#allocation11], 4
      %s85 = int_to_ptr.vmem [resolvable:$true] %s84
      %87 = dma.hbm_to_vmem [thread:$0]  %s7, 32, %s85, [#allocation10]
    $region33: #{tpu_custom_call.1} parent=1 // pred_fallthru
      _
    // Predicated region
    $region34: #{tpu_custom_call.1} parent=1 // pred_check
      _
    $region35: #{tpu_custom_call.1} parent=1 // pred_check_branch
      %89 = sbr.rel (0) target = $region37
    $region36: #{tpu_custom_call.1} parent=1 // pred_region
      _
    $region37: #{tpu_custom_call.1} parent=1 // pred_fallthru
      _
    // Predicated region
    $region38: #{tpu_custom_call.1} parent=1 // pred_check
      _
    $region39: #{tpu_custom_call.1} parent=1 // pred_check_branch
      %91 = sbr.rel (0) target = $region41
    $region40: #{tpu_custom_call.1} parent=1 // pred_region
      _
    $region41: #{tpu_custom_call.1} parent=1 // pred_fallthru
      _
    // Predicated region
    $region42: #{tpu_custom_call.1} parent=1 // pred_check
      _
    $region43: #{tpu_custom_call.1} parent=1 // pred_check_branch
      %93 = sbr.rel (0) target = $region45
    $region44: #{tpu_custom_call.1} parent=1 // pred_region
      %s95 = ssub.s32 16, 16
      %96 = vsyncadd [#allocation13], %s95
      %s98 = sshll.u32 [#allocation12], 4
      %s99 = int_to_ptr.vmem [resolvable:$true] %s98
      %101 = dma.hbm_to_vmem [thread:$0]  %s10, 16, %s99, [#allocation13]
    $region45: #{tpu_custom_call.1} parent=1 // pred_fallthru
      _
    // Predicated region
    $region46: #{tpu_custom_call.1} parent=1 // pred_check
      _
    $region47: #{tpu_custom_call.1} parent=1 // pred_check_branch
      %103 = sbr.rel (0) target = $region49
    $region48: #{tpu_custom_call.1} parent=1 // pred_region
      _
    $region49: #{tpu_custom_call.1} parent=1 // pred_fallthru
      _
    // Predicated region
    $region50: #{tpu_custom_call.1} parent=1 // pred_check
      _
    $region51: #{tpu_custom_call.1} parent=1 // pred_check_branch
      %105 = sbr.rel (0) target = $region53
    $region52: #{tpu_custom_call.1} parent=1 // pred_region
      _
    $region53: #{tpu_custom_call.1} parent=1 // pred_fallthru
      _
    // Predicated region
    $region54: #{tpu_custom_call.1} parent=1 // pred_check
      _
    $region55: #{tpu_custom_call.1} parent=1 // pred_check_branch
      %107 = sbr.rel (0) target = $region57
    $region56: #{tpu_custom_call.1} parent=1 // pred_region
      %s109 = ssub.s32 512, 512
      %110 = vsyncadd [#allocation13], %s109
      %s111 = sshll.u32 [#allocation14], 4
      %s112 = int_to_ptr.vmem [resolvable:$true] %s111
      %117 = dma.hbm_to_vmem [thread:$0]  %s13, 512, %s112, [#allocation13], 256, 256, 16
    $region57: #{tpu_custom_call.1} parent=1 // pred_fallthru
      _
    // Predicated region
    $region58: #{tpu_custom_call.1} parent=1 // pred_check
      _
    $region59: #{tpu_custom_call.1} parent=1 // pred_check_branch
      %119 = sbr.rel (0) target = $region61
    $region60: #{tpu_custom_call.1} parent=1 // pred_region
      _
    $region61: #{tpu_custom_call.1} parent=1 // pred_fallthru
      _
    // Predicated region
    $region62: #{tpu_custom_call.1} parent=1 // pred_check
      _
    $region63: #{tpu_custom_call.1} parent=1 // pred_check_branch
      %121 = sbr.rel (0) target = $region65
    $region64: #{tpu_custom_call.1} parent=1 // pred_region
      %s123 = ssub.s32 4096, 4096
      %124 = vsyncadd [#allocation16], %s123
      %s125 = sshll.u32 [#allocation15], 4
      %s126 = int_to_ptr.vmem [resolvable:$true] %s125
      %131 = dma.hbm_to_vmem [thread:$0]  %s15, 4096, %s126, [#allocation16], 128, 128, 8
    $region65: #{tpu_custom_call.1} parent=1 // pred_fallthru
      _
    // Predicated region
    $region66: #{tpu_custom_call.1} parent=1 // pred_check
      _
    $region67: #{tpu_custom_call.1} parent=1 // pred_check_branch
      %133 = sbr.rel (0) target = $region69
    $region68: #{tpu_custom_call.1} parent=1 // pred_region
      _
    $region69: #{tpu_custom_call.1} parent=1 // pred_fallthru
      _
    // Predicated region
    $region70: #{tpu_custom_call.1} parent=1 // pred_check
      _
    $region71: #{tpu_custom_call.1} parent=1 // pred_check_branch
      %135 = sbr.rel (0) target = $region73
    $region72: #{tpu_custom_call.1} parent=1 // pred_region
      %136 = dma.done [#allocation4], 32
    $region73: #{tpu_custom_call.1} parent=1 // pred_fallthru
      _
    // Predicated region
    $region74: #{tpu_custom_call.1} parent=1 // pred_check
      _
    $region75: #{tpu_custom_call.1} parent=1 // pred_check_branch
      %138 = sbr.rel (0) target = $region77
    $region76: #{tpu_custom_call.1} parent=1 // pred_region
      %139 = dma.done [#allocation7], 512
    $region77: #{tpu_custom_call.1} parent=1 // pred_fallthru
      _
    // Predicated region
    $region78: #{tpu_custom_call.1} parent=1 // pred_check
      _
    $region79: #{tpu_custom_call.1} parent=1 // pred_check_branch
      %141 = sbr.rel (0) target = $region81
    $region80: #{tpu_custom_call.1} parent=1 // pred_region
      %142 = dma.done [#allocation7], 32
    $region81: #{tpu_custom_call.1} parent=1 // pred_fallthru
      _
    // Predicated region
    $region82: #{tpu_custom_call.1} parent=1 // pred_check
      _
    $region83: #{tpu_custom_call.1} parent=1 // pred_check_branch
      %144 = sbr.rel (0) target = $region85
    $region84: #{tpu_custom_call.1} parent=1 // pred_region
      %145 = dma.done [#allocation10], 512
    $region85: #{tpu_custom_call.1} parent=1 // pred_fallthru
      _
    // Predicated region
    $region86: #{tpu_custom_call.1} parent=1 // pred_check
      _
    $region87: #{tpu_custom_call.1} parent=1 // pred_check_branch
      %147 = sbr.rel (0) target = $region89
    $region88: #{tpu_custom_call.1} parent=1 // pred_region
      %148 = dma.done [#allocation10], 32
    $region89: #{tpu_custom_call.1} parent=1 // pred_fallthru
      _
    // Predicated region
    $region90: #{tpu_custom_call.1} parent=1 // pred_check
      _
    $region91: #{tpu_custom_call.1} parent=1 // pred_check_branch
      %150 = sbr.rel (0) target = $region93
    $region92: #{tpu_custom_call.1} parent=1 // pred_region
      %151 = dma.done [#allocation13], 16
    $region93: #{tpu_custom_call.1} parent=1 // pred_fallthru
      _
    // Predicated region
    $region94: #{tpu_custom_call.1} parent=1 // pred_check
      _
    $region95: #{tpu_custom_call.1} parent=1 // pred_check_branch
      %153 = sbr.rel (0) target = $region97
    $region96: #{tpu_custom_call.1} parent=1 // pred_region
      %154 = dma.done [#allocation13], 512
    $region97: #{tpu_custom_call.1} parent=1 // pred_fallthru
      _
    // Predicated region
    $region98: #{tpu_custom_call.1} parent=1 // pred_check
      _
    $region99: #{tpu_custom_call.1} parent=1 // pred_check_branch
      %156 = sbr.rel (0) target = $region101
    $region100: #{tpu_custom_call.1} parent=1 // pred_region
      %157 = dma.done [#allocation16], 4096
    $region101: #{tpu_custom_call.1} parent=1 // pred_fallthru
      _
    %v158 = vld [vmem:[%s0] sm:$0xff]
    %v159 = vld [vmem:[%s0 + $0x8] sm:$0xff]
    %v160 = vld [vmem:[%s0 + $0x10] sm:$0xff]
    %v161 = vld [vmem:[%s0 + $0x18] sm:$0xff]
    %v162 = vld [vmem:[%s1] sm:$0xff]
    %v163 = vld [vmem:[%s1 + $0x8] sm:$0xff]
    %v164 = vld [vmem:[%s1 + $0x10] sm:$0xff]
    %v165 = vld [vmem:[%s1 + $0x18] sm:$0xff]
    %v166 = vld [vmem:[%s1 + $0x20] sm:$0xff]
    %v167 = vld [vmem:[%s1 + $0x28] sm:$0xff]
    %v168 = vld [vmem:[%s1 + $0x30] sm:$0xff]
    %v169 = vld [vmem:[%s1 + $0x38] sm:$0xff]
    %v170 = vld [vmem:[%s1 + $0x40] sm:$0xff]
    %v171 = vld [vmem:[%s1 + $0x48] sm:$0xff]
    %v172 = vld [vmem:[%s1 + $0x50] sm:$0xff]
    %v173 = vld [vmem:[%s1 + $0x58] sm:$0xff]
    %v174 = vld [vmem:[%s1 + $0x60] sm:$0xff]
    %v175 = vld [vmem:[%s1 + $0x68] sm:$0xff]
    %v176 = vld [vmem:[%s1 + $0x70] sm:$0xff]
    %v177 = vld [vmem:[%s1 + $0x78] sm:$0xff]
    %v178 = vld [vmem:[%s1 + $0x80] sm:$0xff]
    %v179 = vld [vmem:[%s1 + $0x88] sm:$0xff]
    %v180 = vld [vmem:[%s1 + $0x90] sm:$0xff]
    %v181 = vld [vmem:[%s1 + $0x98] sm:$0xff]
    %v182 = vld [vmem:[%s1 + $0xa0] sm:$0xff]
    %v183 = vld [vmem:[%s1 + $0xa8] sm:$0xff]
    %v184 = vld [vmem:[%s1 + $0xb0] sm:$0xff]
    %v185 = vld [vmem:[%s1 + $0xb8] sm:$0xff]
    %v186 = vld [vmem:[%s1 + $0xc0] sm:$0xff]
    %v187 = vld [vmem:[%s1 + $0xc8] sm:$0xff]
    %v188 = vld [vmem:[%s1 + $0xd0] sm:$0xff]
    %v189 = vld [vmem:[%s1 + $0xd8] sm:$0xff]
    %v190 = vld [vmem:[%s1 + $0xe0] sm:$0xff]
    %v191 = vld [vmem:[%s1 + $0xe8] sm:$0xff]
    %v192 = vld [vmem:[%s1 + $0xf0] sm:$0xff]
    %v193 = vld [vmem:[%s1 + $0xf8] sm:$0xff]
    %v194 = vld [vmem:[#allocation3] sm:$0x3]
    %v196 = vlaneseq
    %v197 = vshrl.u32 %v196, 7
    %v198 = vsub.s32 0, %v197
    %v199 = vrot.slane %v194, %v198
    %v200 = vlaneseq
    %v201 = vshrl.u32 %v200, 7
    %v202 = vsub.s32 1, %v201
    %v203 = vrot.slane %v194, %v202
    %206 = vmatprep.subr.mxu0 %v193
    %207 = vmatpush1.msra.mxu0 %v192
    %208 = vmatprep.subr.mxu0 %v191
    %209 = vmatpush1.msra.mxu0 %v190
    %210 = vmatprep.subr.mxu0 %v189
    %211 = vmatpush1.msra.mxu0 %v188
    %212 = vmatprep.subr.mxu0 %v187
    %213 = vmatpush1.msra.mxu0 %v186
    %214 = vmatprep.subr.mxu0 %v185
    %215 = vmatpush1.msra.mxu0 %v184
    %216 = vmatprep.subr.mxu0 %v183
    %217 = vmatpush1.msra.mxu0 %v182
    %218 = vmatprep.subr.mxu0 %v181
    %219 = vmatpush1.msra.mxu0 %v180
    %220 = vmatprep.subr.mxu0 %v179
    %221 = vmatpush1.msra.mxu0 %v178
    %222 = vmatprep.subr.mxu0 %v177
    %223 = vmatpush1.msra.mxu0 %v176
    %224 = vmatprep.subr.mxu0 %v175
    %225 = vmatpush1.msra.mxu0 %v174
    %226 = vmatprep.subr.mxu0 %v173
    %227 = vmatpush1.msra.mxu0 %v172
    %228 = vmatprep.subr.mxu0 %v171
    %229 = vmatpush1.msra.mxu0 %v170
    %230 = vmatprep.subr.mxu0 %v169
    %231 = vmatpush1.msra.mxu0 %v168
    %232 = vmatprep.subr.mxu0 %v167
    %233 = vmatpush1.msra.mxu0 %v166
    %234 = vmatprep.subr.mxu0 %v165
    %235 = vmatpush1.msra.mxu0 %v164
    %236 = vmatprep.subr.mxu0 %v163
    %237 = vmatpush1.msra.mxu0 %v162
    %238 = vmatprep.subr.mxu0 0.0
    %239 = vmatpush2.msra.mxu0 0.0
    %240 = vmatprep.subr.mxu0 0.0
    %241 = vmatpush2.msra.mxu0 0.0
    %242 = vmatprep.subr.mxu0 0.0
    %243 = vmatpush2.msra.mxu0 0.0
    %244 = vmatprep.subr.mxu0 0.0
    %245 = vmatpush2.msra.mxu0 0.0
    %246 = vmatprep.subr.mxu0 0.0
    %247 = vmatpush2.msra.mxu0 0.0
    %248 = vmatprep.subr.mxu0 0.0
    %249 = vmatpush2.msra.mxu0 0.0
    %250 = vmatprep.subr.mxu0 0.0
    %251 = vmatpush2.msra.mxu0 0.0
    %252 = vmatprep.subr.mxu0 0.0
    %253 = vmatpush2.msra.mxu0 0.0
    %254 = vmatprep.subr.mxu0 0.0
    %255 = vmatpush2.msra.mxu0 0.0
    %256 = vmatprep.subr.mxu0 0.0
    %257 = vmatpush2.msra.mxu0 0.0
    %258 = vmatprep.subr.mxu0 0.0
    %259 = vmatpush2.msra.mxu0 0.0
    %260 = vmatprep.subr.mxu0 0.0
    %261 = vmatpush2.msra.mxu0 0.0
    %262 = vmatprep.subr.mxu0 0.0
    %263 = vmatpush2.msra.mxu0 0.0
    %264 = vmatprep.subr.mxu0 0.0
    %265 = vmatpush2.msra.mxu0 0.0
    %266 = vmatprep.subr.mxu0 0.0
    %267 = vmatpush2.msra.mxu0 0.0
    %268 = vmatprep.subr.mxu0 0.0
    %269 = vmatpush2.msra.mxu0 0.0
    %270 = vmatprep.mubr.f32.mxu0 0.0
    %271 = vmatmul.mubr.f32.gmra.mxu0 %v158
    %v272 = vpop.f32.mrf.mxu0
    %v273 = vadd.f32 %v199, %v272
    %v274 = vpop.f32.mrf.mxu0
    %v275 = vadd.f32 %v203, %v274
    %276 = vmatprep.mubr.f32.mxu0 0.0
    %277 = vmatmul.mubr.f32.gmra.mxu0 %v159
    %v278 = vpop.f32.mrf.mxu0
    %v279 = vadd.f32 %v199, %v278
    %v280 = vpop.f32.mrf.mxu0
    %v281 = vadd.f32 %v203, %v280
    %282 = vmatprep.mubr.f32.mxu0 0.0
    %283 = vmatmul.mubr.f32.gmra.mxu0 %v160
    %v284 = vpop.f32.mrf.mxu0
    %v285 = vadd.f32 %v199, %v284
    %v286 = vpop.f32.mrf.mxu0
    %v287 = vadd.f32 %v203, %v286
    %288 = vmatprep.mubr.f32.mxu0 0.0
    %289 = vmatmul.mubr.f32.gmra.mxu0 %v161
    %v290 = vpop.f32.mrf.mxu0
    %v291 = vadd.f32 %v199, %v290
    %v292 = vpop.f32.mrf.mxu0
    %v293 = vadd.f32 %v203, %v292
    %294 = vdwg.mxu0
    %v295 = vadd.f32 %v273, 3.0
    %v296 = vadd.f32 %v275, 3.0
    %v297 = vadd.f32 %v279, 3.0
    %v298 = vadd.f32 %v281, 3.0
    %v299 = vadd.f32 %v285, 3.0
    %v300 = vadd.f32 %v287, 3.0
    %v301 = vadd.f32 %v291, 3.0
    %v302 = vadd.f32 %v293, 3.0
    %v303 = vmax.f32 %v295, 0.0
    %v304 = vmax.f32 %v296, 0.0
    %v305 = vmax.f32 %v297, 0.0
    %v306 = vmax.f32 %v298, 0.0
    %v307 = vmax.f32 %v299, 0.0
    %v308 = vmax.f32 %v300, 0.0
    %v309 = vmax.f32 %v301, 0.0
    %v310 = vmax.f32 %v302, 0.0
    %v311 = vmin.f32 %v303, 6.0
    %v312 = vmin.f32 %v304, 6.0
    %v313 = vmin.f32 %v305, 6.0
    %v314 = vmin.f32 %v306, 6.0
    %v315 = vmin.f32 %v307, 6.0
    %v316 = vmin.f32 %v308, 6.0
    %v317 = vmin.f32 %v309, 6.0
    %v318 = vmin.f32 %v310, 6.0
    %v319 = vmul.f32 %v273, %v311
    %v320 = vmul.f32 %v275, %v312
    %v321 = vmul.f32 %v279, %v313
    %v322 = vmul.f32 %v281, %v314
    %v323 = vmul.f32 %v285, %v315
    %v324 = vmul.f32 %v287, %v316
    %v325 = vmul.f32 %v291, %v317
    %v326 = vmul.f32 %v293, %v318
    %v327 = vmul.f32 %v319, 0.16666667
    %v328 = vmul.f32 %v320, 0.16666667
    %v329 = vmul.f32 %v321, 0.16666667
    %v330 = vmul.f32 %v322, 0.16666667
    %v331 = vmul.f32 %v323, 0.16666667
    %v332 = vmul.f32 %v324, 0.16666667
    %v333 = vmul.f32 %v325, 0.16666667
    %v334 = vmul.f32 %v326, 0.16666667
    %vm335 = vcmask 1048448
    %336 = vst.msk [vmem:[#allocation2] sm:$0xff] %vm335, 0.0
    %337 = vst.msk [vmem:[#allocation2 + $0x20] sm:$0xff] %vm335, 0.0
    %338 = vst.msk [vmem:[#allocation2 + $0x40] sm:$0xff] %vm335, 0.0
    %339 = vst.msk [vmem:[#allocation2 + $0x60] sm:$0xff] %vm335, 0.0
    %vm340 = vcmask 130048
    %341 = vst.msk [vmem:[#allocation2 + $0x18] sm:$0xff] %vm340, 0.0
    %342 = vst.msk [vmem:[#allocation2 + $0x38] sm:$0xff] %vm340, 0.0
    %343 = vst.msk [vmem:[#allocation2 + $0x58] sm:$0xff] %vm340, 0.0
    %344 = vst.msk [vmem:[#allocation2 + $0x78] sm:$0xff] %vm340, 0.0
    %345 = vst [vmem:[#allocation2 + $0x8] sm:$0xff] %v327
    %346 = vst [vmem:[#allocation2 + $0x10] sm:$0xff] %v328
    %347 = vst [vmem:[#allocation2 + $0x28] sm:$0xff] %v329
    %348 = vst [vmem:[#allocation2 + $0x30] sm:$0xff] %v330
    %349 = vst [vmem:[#allocation2 + $0x48] sm:$0xff] %v331
    %350 = vst [vmem:[#allocation2 + $0x50] sm:$0xff] %v332
    %351 = vst [vmem:[#allocation2 + $0x68] sm:$0xff] %v333
    %352 = vst [vmem:[#allocation2 + $0x70] sm:$0xff] %v334
    %v353 = vld [vmem:[#allocation6] sm:$0xff]
    %v354 = vld [vmem:[#allocation6 + $0x8] sm:$0xff]
    %v355 = vld [vmem:[#allocation6 + $0x10] sm:$0x1]
    %v356 = vld [vmem:[#allocation6 + $0x18] sm:$0x1]
    %v357 = vld [vmem:[#allocation2] sm:$0xff]
    %v358 = vld [vmem:[#allocation2 + $0x8] sm:$0xff]
    %v359 = vld [vmem:[#allocation2 + $0x10] sm:$0xff]
    %v360 = vld [vmem:[#allocation2 + $0x20] sm:$0xff]
    %v361 = vld [vmem:[#allocation2 + $0x28] sm:$0xff]
    %v362 = vld [vmem:[#allocation2 + $0x30] sm:$0xff]
    %v363 = vld [vmem:[#allocation2 + $0x40] sm:$0xff]
    %v364 = vld [vmem:[#allocation2 + $0x48] sm:$0xff]
    %v365 = vld [vmem:[#allocation2 + $0x50] sm:$0xff]
    %v366 = vld [vmem:[#allocation2 + $0x60] sm:$0xff]
    %v367 = vld [vmem:[#allocation2 + $0x68] sm:$0xff]
    %v368 = vld [vmem:[#allocation2 + $0x70] sm:$0xff]
    %v369 = vld [vmem:[#allocation2 + $0x18] sm:$0xff]
    %v370 = vld [vmem:[#allocation2 + $0x38] sm:$0xff]
    %v371 = vld [vmem:[#allocation2 + $0x58] sm:$0xff]
    %v372 = vld [vmem:[#allocation2 + $0x78] sm:$0xff]
    %v373 = vlaneseq
    %v374 = vshrl.u32 %v373, 7
    %v375 = vsub.s32 0, %v374
    %v376 = vrot.slane %v353, %v375
    %v377 = vlaneseq
    %v378 = vshrl.u32 %v377, 7
    %v379 = vsub.s32 0, %v378
    %v380 = vrot.slane %v354, %v379
    %383 = vrot.lane.b32.xlu0 %v376, 112
    %v384 = vpop.permute.xlu0 %383
    %385 = vrot.lane.b32.xlu0 %v380, 112
    %v386 = vpop.permute.xlu0 %385
    %vm387 = vcmask 916480
    %v388 = vsel %vm387, %v384, %v386
    %v392 = vmul.f32 %v357, %v384
    %v393 = vmul.f32 %v358, %v388
    %v394 = vmul.f32 %v359, %v386
    %v395 = vmul.f32 %v360, %v384
    %v396 = vmul.f32 %v361, %v388
    %v397 = vmul.f32 %v362, %v386
    %v398 = vmul.f32 %v363, %v384
    %v399 = vmul.f32 %v364, %v388
    %v400 = vmul.f32 %v365, %v386
    %v401 = vmul.f32 %v366, %v384
    %v402 = vmul.f32 %v367, %v388
    %v403 = vmul.f32 %v368, %v386
    %v404 = vlaneseq
    %v405 = vshrl.u32 %v404, 7
    %v406 = vsub.s32 1, %v405
    %v407 = vrot.slane %v353, %v406
    %v408 = vlaneseq
    %v409 = vshrl.u32 %v408, 7
    %v410 = vsub.s32 1, %v409
    %v411 = vrot.slane %v354, %v410
    %v412 = vmul.f32 %v327, %v407
    %v413 = vmul.f32 %v328, %v411
    %v414 = vmul.f32 %v329, %v407
    %v415 = vmul.f32 %v330, %v411
    %v416 = vmul.f32 %v331, %v407
    %v417 = vmul.f32 %v332, %v411
    %v418 = vmul.f32 %v333, %v407
    %v419 = vmul.f32 %v334, %v411
    %428 = vrot.lane.b32.xlu0 %v412, 112
    %v429 = vpop.permute.xlu0 %428
    %430 = vrot.lane.b32.xlu0 %v413, 112
    %v431 = vpop.permute.xlu0 %430
    %432 = vrot.lane.b32.xlu0 %v414, 112
    %v433 = vpop.permute.xlu0 %432
    %434 = vrot.lane.b32.xlu0 %v415, 112
    %v435 = vpop.permute.xlu0 %434
    %436 = vrot.lane.b32.xlu0 %v416, 112
    %v437 = vpop.permute.xlu0 %436
    %438 = vrot.lane.b32.xlu0 %v417, 112
    %v439 = vpop.permute.xlu0 %438
    %440 = vrot.lane.b32.xlu0 %v418, 112
    %v441 = vpop.permute.xlu0 %440
    %442 = vrot.lane.b32.xlu0 %v419, 112
    %v443 = vpop.permute.xlu0 %442
    %v444 = vsel %vm387, %v429, %v431
    %v445 = vsel %vm387, %v433, %v435
    %v446 = vsel %vm387, %v437, %v439
    %v447 = vsel %vm387, %v441, %v443
    %v460 = vadd.f32 %v392, %v429
    %v461 = vadd.f32 %v393, %v444
    %v462 = vadd.f32 %v394, %v431
    %v463 = vadd.f32 %v395, %v433
    %v464 = vadd.f32 %v396, %v445
    %v465 = vadd.f32 %v397, %v435
    %v466 = vadd.f32 %v398, %v437
    %v467 = vadd.f32 %v399, %v446
    %v468 = vadd.f32 %v400, %v439
    %v469 = vadd.f32 %v401, %v441
    %v470 = vadd.f32 %v402, %v447
    %v471 = vadd.f32 %v403, %v443
    %v472 = vlaneseq
    %v473 = vshrl.u32 %v472, 7
    %v474 = vsub.s32 2, %v473
    %v475 = vrot.slane %v353, %v474
    %v476 = vlaneseq
    %v477 = vshrl.u32 %v476, 7
    %v478 = vsub.s32 2, %v477
    %v479 = vrot.slane %v354, %v478
    %482 = vrot.lane.b32.xlu0 %v475, 16
    %v483 = vpop.permute.xlu0 %482
    %484 = vrot.lane.b32.xlu0 %v479, 16
    %v485 = vpop.permute.xlu0 %484
    %v486 = vsel %vm340, %v483, %v485
    %v490 = vmul.f32 %v358, %v483
    %v491 = vmul.f32 %v359, %v486
    %v492 = vmul.f32 %v369, %v485
    %v493 = vmul.f32 %v361, %v483
    %v494 = vmul.f32 %v362, %v486
    %v495 = vmul.f32 %v370, %v485
    %v496 = vmul.f32 %v364, %v483
    %v497 = vmul.f32 %v365, %v486
    %v498 = vmul.f32 %v371, %v485
    %v499 = vmul.f32 %v367, %v483
    %v500 = vmul.f32 %v368, %v486
    %v501 = vmul.f32 %v372, %v485
    %514 = vrot.lane.b32.xlu0 %v490, 96
    %v515 = vpop.permute.xlu0 %514
    %516 = vrot.lane.b32.xlu0 %v491, 96
    %v517 = vpop.permute.xlu0 %516
    %518 = vrot.lane.b32.xlu0 %v492, 96
    %v519 = vpop.permute.xlu0 %518
    %520 = vrot.lane.b32.xlu0 %v493, 96
    %v521 = vpop.permute.xlu0 %520
    %522 = vrot.lane.b32.xlu0 %v494, 96
    %v523 = vpop.permute.xlu0 %522
    %524 = vrot.lane.b32.xlu0 %v495, 96
    %v525 = vpop.permute.xlu0 %524
    %526 = vrot.lane.b32.xlu0 %v496, 96
    %v527 = vpop.permute.xlu0 %526
    %528 = vrot.lane.b32.xlu0 %v497, 96
    %v529 = vpop.permute.xlu0 %528
    %530 = vrot.lane.b32.xlu0 %v498, 96
    %v531 = vpop.permute.xlu0 %530
    %532 = vrot.lane.b32.xlu0 %v499, 96
    %v533 = vpop.permute.xlu0 %532
    %534 = vrot.lane.b32.xlu0 %v500, 96
    %v535 = vpop.permute.xlu0 %534
    %536 = vrot.lane.b32.xlu0 %v501, 96
    %v537 = vpop.permute.xlu0 %536
    %vm538 = vcmask 785408
    %v539 = vsel %vm538, %v515, %v517
    %v540 = vsel %vm538, %v517, %v519
    %v541 = vsel %vm538, %v521, %v523
    %v542 = vsel %vm538, %v523, %v525
    %v543 = vsel %vm538, %v527, %v529
    %v544 = vsel %vm538, %v529, %v531
    %v545 = vsel %vm538, %v533, %v535
    %v546 = vsel %vm538, %v535, %v537
    %v559 = vadd.f32 %v460, %v515
    %v560 = vadd.f32 %v461, %v539
    %v561 = vadd.f32 %v462, %v540
    %v562 = vadd.f32 %v463, %v521
    %v563 = vadd.f32 %v464, %v541
    %v564 = vadd.f32 %v465, %v542
    %v565 = vadd.f32 %v466, %v527
    %v566 = vadd.f32 %v467, %v543
    %v567 = vadd.f32 %v468, %v544
    %v568 = vadd.f32 %v469, %v533
    %v569 = vadd.f32 %v470, %v545
    %v570 = vadd.f32 %v471, %v546
    %v571 = vlaneseq
    %v572 = vshrl.u32 %v571, 7
    %v573 = vsub.s32 3, %v572
    %v574 = vrot.slane %v353, %v573
    %v575 = vlaneseq
    %v576 = vshrl.u32 %v575, 7
    %v577 = vsub.s32 3, %v576
    %v578 = vrot.slane %v354, %v577
    %581 = vrot.lane.b32.xlu0 %v574, 112
    %v582 = vpop.permute.xlu0 %581
    %583 = vrot.lane.b32.xlu0 %v578, 112
    %v584 = vpop.permute.xlu0 %583
    %v585 = vsel %vm387, %v582, %v584
    %v589 = vmul.f32 %v357, %v582
    %v590 = vmul.f32 %v358, %v585
    %v591 = vmul.f32 %v359, %v584
    %v592 = vmul.f32 %v360, %v582
    %v593 = vmul.f32 %v361, %v585
    %v594 = vmul.f32 %v362, %v584
    %v595 = vmul.f32 %v363, %v582
    %v596 = vmul.f32 %v364, %v585
    %v597 = vmul.f32 %v365, %v584
    %v598 = vmul.f32 %v366, %v582
    %v599 = vmul.f32 %v367, %v585
    %v600 = vmul.f32 %v368, %v584
    %v601 = vlaneseq
    %v602 = vshrl.u32 %v601, 7
    %v603 = vsub.s32 4, %v602
    %v604 = vrot.slane %v353, %v603
    %v605 = vlaneseq
    %v606 = vshrl.u32 %v605, 7
    %v607 = vsub.s32 4, %v606
    %v608 = vrot.slane %v354, %v607
    %v609 = vmul.f32 %v327, %v604
    %v610 = vmul.f32 %v328, %v608
    %v611 = vmul.f32 %v329, %v604
    %v612 = vmul.f32 %v330, %v608
    %v613 = vmul.f32 %v331, %v604
    %v614 = vmul.f32 %v332, %v608
    %v615 = vmul.f32 %v333, %v604
    %v616 = vmul.f32 %v334, %v608
    %625 = vrot.lane.b32.xlu0 %v609, 112
    %v626 = vpop.permute.xlu0 %625
    %627 = vrot.lane.b32.xlu0 %v610, 112
    %v628 = vpop.permute.xlu0 %627
    %629 = vrot.lane.b32.xlu0 %v611, 112
    %v630 = vpop.permute.xlu0 %629
    %631 = vrot.lane.b32.xlu0 %v612, 112
    %v632 = vpop.permute.xlu0 %631
    %633 = vrot.lane.b32.xlu0 %v613, 112
    %v634 = vpop.permute.xlu0 %633
    %635 = vrot.lane.b32.xlu0 %v614, 112
    %v636 = vpop.permute.xlu0 %635
    %637 = vrot.lane.b32.xlu0 %v615, 112
    %v638 = vpop.permute.xlu0 %637
    %639 = vrot.lane.b32.xlu0 %v616, 112
    %v640 = vpop.permute.xlu0 %639
    %v641 = vsel %vm387, %v626, %v628
    %v642 = vsel %vm387, %v630, %v632
    %v643 = vsel %vm387, %v634, %v636
    %v644 = vsel %vm387, %v638, %v640
    %v657 = vadd.f32 %v589, %v626
    %v658 = vadd.f32 %v590, %v641
    %v659 = vadd.f32 %v591, %v628
    %v660 = vadd.f32 %v592, %v630
    %v661 = vadd.f32 %v593, %v642
    %v662 = vadd.f32 %v594, %v632
    %v663 = vadd.f32 %v595, %v634
    %v664 = vadd.f32 %v596, %v643
    %v665 = vadd.f32 %v597, %v636
    %v666 = vadd.f32 %v598, %v638
    %v667 = vadd.f32 %v599, %v644
    %v668 = vadd.f32 %v600, %v640
    %v669 = vlaneseq
    %v670 = vshrl.u32 %v669, 7
    %v671 = vsub.s32 5, %v670
    %v672 = vrot.slane %v353, %v671
    %v673 = vlaneseq
    %v674 = vshrl.u32 %v673, 7
    %v675 = vsub.s32 5, %v674
    %v676 = vrot.slane %v354, %v675
    %679 = vrot.lane.b32.xlu0 %v672, 16
    %v680 = vpop.permute.xlu0 %679
    %681 = vrot.lane.b32.xlu0 %v676, 16
    %v682 = vpop.permute.xlu0 %681
    %v683 = vsel %vm340, %v680, %v682
    %v687 = vmul.f32 %v358, %v680
    %v688 = vmul.f32 %v359, %v683
    %v689 = vmul.f32 %v369, %v682
    %v690 = vmul.f32 %v361, %v680
    %v691 = vmul.f32 %v362, %v683
    %v692 = vmul.f32 %v370, %v682
    %v693 = vmul.f32 %v364, %v680
    %v694 = vmul.f32 %v365, %v683
    %v695 = vmul.f32 %v371, %v682
    %v696 = vmul.f32 %v367, %v680
    %v697 = vmul.f32 %v368, %v683
    %v698 = vmul.f32 %v372, %v682
    %711 = vrot.lane.b32.xlu0 %v687, 96
    %v712 = vpop.permute.xlu0 %711
    %713 = vrot.lane.b32.xlu0 %v688, 96
    %v714 = vpop.permute.xlu0 %713
    %715 = vrot.lane.b32.xlu0 %v689, 96
    %v716 = vpop.permute.xlu0 %715
    %717 = vrot.lane.b32.xlu0 %v690, 96
    %v718 = vpop.permute.xlu0 %717
    %719 = vrot.lane.b32.xlu0 %v691, 96
    %v720 = vpop.permute.xlu0 %719
    %721 = vrot.lane.b32.xlu0 %v692, 96
    %v722 = vpop.permute.xlu0 %721
    %723 = vrot.lane.b32.xlu0 %v693, 96
    %v724 = vpop.permute.xlu0 %723
    %725 = vrot.lane.b32.xlu0 %v694, 96
    %v726 = vpop.permute.xlu0 %725
    %727 = vrot.lane.b32.xlu0 %v695, 96
    %v728 = vpop.permute.xlu0 %727
    %729 = vrot.lane.b32.xlu0 %v696, 96
    %v730 = vpop.permute.xlu0 %729
    %731 = vrot.lane.b32.xlu0 %v697, 96
    %v732 = vpop.permute.xlu0 %731
    %733 = vrot.lane.b32.xlu0 %v698, 96
    %v734 = vpop.permute.xlu0 %733
    %v735 = vsel %vm538, %v712, %v714
    %v736 = vsel %vm538, %v714, %v716
    %v737 = vsel %vm538, %v718, %v720
    %v738 = vsel %vm538, %v720, %v722
    %v739 = vsel %vm538, %v724, %v726
    %v740 = vsel %vm538, %v726, %v728
    %v741 = vsel %vm538, %v730, %v732
    %v742 = vsel %vm538, %v732, %v734
    %v755 = vadd.f32 %v657, %v712
    %v756 = vadd.f32 %v658, %v735
    %v757 = vadd.f32 %v659, %v736
    %v758 = vadd.f32 %v660, %v718
    %v759 = vadd.f32 %v661, %v737
    %v760 = vadd.f32 %v662, %v738
    %v761 = vadd.f32 %v663, %v724
    %v762 = vadd.f32 %v664, %v739
    %v763 = vadd.f32 %v665, %v740
    %v764 = vadd.f32 %v666, %v730
    %v765 = vadd.f32 %v667, %v741
    %v766 = vadd.f32 %v668, %v742
    %v767 = vlaneseq
    %v768 = vshrl.u32 %v767, 7
    %v769 = vsub.s32 6, %v768
    %v770 = vrot.slane %v353, %v769
    %v771 = vlaneseq
    %v772 = vshrl.u32 %v771, 7
    %v773 = vsub.s32 6, %v772
    %v774 = vrot.slane %v354, %v773
    %777 = vrot.lane.b32.xlu0 %v770, 112
    %v778 = vpop.permute.xlu0 %777
    %779 = vrot.lane.b32.xlu0 %v774, 112
    %v780 = vpop.permute.xlu0 %779
    %v781 = vsel %vm387, %v778, %v780
    %v785 = vmul.f32 %v357, %v778
    %v786 = vmul.f32 %v358, %v781
    %v787 = vmul.f32 %v359, %v780
    %v788 = vmul.f32 %v360, %v778
    %v789 = vmul.f32 %v361, %v781
    %v790 = vmul.f32 %v362, %v780
    %v791 = vmul.f32 %v363, %v778
    %v792 = vmul.f32 %v364, %v781
    %v793 = vmul.f32 %v365, %v780
    %v794 = vmul.f32 %v366, %v778
    %v795 = vmul.f32 %v367, %v781
    %v796 = vmul.f32 %v368, %v780
    %v797 = vlaneseq
    %v798 = vshrl.u32 %v797, 7
    %v799 = vsub.s32 7, %v798
    %v800 = vrot.slane %v353, %v799
    %v801 = vlaneseq
    %v802 = vshrl.u32 %v801, 7
    %v803 = vsub.s32 7, %v802
    %v804 = vrot.slane %v354, %v803
    %v805 = vmul.f32 %v327, %v800
    %v806 = vmul.f32 %v328, %v804
    %v807 = vmul.f32 %v329, %v800
    %v808 = vmul.f32 %v330, %v804
    %v809 = vmul.f32 %v331, %v800
    %v810 = vmul.f32 %v332, %v804
    %v811 = vmul.f32 %v333, %v800
    %v812 = vmul.f32 %v334, %v804
    %821 = vrot.lane.b32.xlu0 %v805, 112
    %v822 = vpop.permute.xlu0 %821
    %823 = vrot.lane.b32.xlu0 %v806, 112
    %v824 = vpop.permute.xlu0 %823
    %825 = vrot.lane.b32.xlu0 %v807, 112
    %v826 = vpop.permute.xlu0 %825
    %827 = vrot.lane.b32.xlu0 %v808, 112
    %v828 = vpop.permute.xlu0 %827
    %829 = vrot.lane.b32.xlu0 %v809, 112
    %v830 = vpop.permute.xlu0 %829
    %831 = vrot.lane.b32.xlu0 %v810, 112
    %v832 = vpop.permute.xlu0 %831
    %833 = vrot.lane.b32.xlu0 %v811, 112
    %v834 = vpop.permute.xlu0 %833
    %835 = vrot.lane.b32.xlu0 %v812, 112
    %v836 = vpop.permute.xlu0 %835
    %v837 = vsel %vm387, %v822, %v824
    %v838 = vsel %vm387, %v826, %v828
    %v839 = vsel %vm387, %v830, %v832
    %v840 = vsel %vm387, %v834, %v836
    %v853 = vadd.f32 %v785, %v822
    %v854 = vadd.f32 %v786, %v837
    %v855 = vadd.f32 %v787, %v824
    %v856 = vadd.f32 %v788, %v826
    %v857 = vadd.f32 %v789, %v838
    %v858 = vadd.f32 %v790, %v828
    %v859 = vadd.f32 %v791, %v830
    %v860 = vadd.f32 %v792, %v839
    %v861 = vadd.f32 %v793, %v832
    %v862 = vadd.f32 %v794, %v834
    %v863 = vadd.f32 %v795, %v840
    %v864 = vadd.f32 %v796, %v836
    %v865 = vlaneseq
    %v866 = vshrl.u32 %v865, 7
    %v867 = vsub.s32 0, %v866
    %v868 = vrot.slane %v355, %v867
    %v869 = vlaneseq
    %v870 = vshrl.u32 %v869, 7
    %v871 = vsub.s32 0, %v870
    %v872 = vrot.slane %v356, %v871
    %875 = vrot.lane.b32.xlu0 %v868, 16
    %v876 = vpop.permute.xlu0 %875
    %877 = vrot.lane.b32.xlu0 %v872, 16
    %v878 = vpop.permute.xlu0 %877
    %v879 = vsel %vm340, %v876, %v878
    %v883 = vmul.f32 %v358, %v876
    %v884 = vmul.f32 %v359, %v879
    %v885 = vmul.f32 %v369, %v878
    %v886 = vmul.f32 %v361, %v876
    %v887 = vmul.f32 %v362, %v879
    %v888 = vmul.f32 %v370, %v878
    %v889 = vmul.f32 %v364, %v876
    %v890 = vmul.f32 %v365, %v879
    %v891 = vmul.f32 %v371, %v878
    %v892 = vmul.f32 %v367, %v876
    %v893 = vmul.f32 %v368, %v879
    %v894 = vmul.f32 %v372, %v878
    %907 = vrot.lane.b32.xlu0 %v883, 96
    %v908 = vpop.permute.xlu0 %907
    %909 = vrot.lane.b32.xlu0 %v884, 96
    %v910 = vpop.permute.xlu0 %909
    %911 = vrot.lane.b32.xlu0 %v885, 96
    %v912 = vpop.permute.xlu0 %911
    %913 = vrot.lane.b32.xlu0 %v886, 96
    %v914 = vpop.permute.xlu0 %913
    %915 = vrot.lane.b32.xlu0 %v887, 96
    %v916 = vpop.permute.xlu0 %915
    %917 = vrot.lane.b32.xlu0 %v888, 96
    %v918 = vpop.permute.xlu0 %917
    %919 = vrot.lane.b32.xlu0 %v889, 96
    %v920 = vpop.permute.xlu0 %919
    %921 = vrot.lane.b32.xlu0 %v890, 96
    %v922 = vpop.permute.xlu0 %921
    %923 = vrot.lane.b32.xlu0 %v891, 96
    %v924 = vpop.permute.xlu0 %923
    %925 = vrot.lane.b32.xlu0 %v892, 96
    %v926 = vpop.permute.xlu0 %925
    %927 = vrot.lane.b32.xlu0 %v893, 96
    %v928 = vpop.permute.xlu0 %927
    %929 = vrot.lane.b32.xlu0 %v894, 96
    %v930 = vpop.permute.xlu0 %929
    %v931 = vsel %vm538, %v908, %v910
    %v932 = vsel %vm538, %v910, %v912
    %v933 = vsel %vm538, %v914, %v916
    %v934 = vsel %vm538, %v916, %v918
    %v935 = vsel %vm538, %v920, %v922
    %v936 = vsel %vm538, %v922, %v924
    %v937 = vsel %vm538, %v926, %v928
    %v938 = vsel %vm538, %v928, %v930
    %v951 = vadd.f32 %v853, %v908
    %v952 = vadd.f32 %v854, %v931
    %v953 = vadd.f32 %v855, %v932
    %v954 = vadd.f32 %v856, %v914
    %v955 = vadd.f32 %v857, %v933
    %v956 = vadd.f32 %v858, %v934
    %v957 = vadd.f32 %v859, %v920
    %v958 = vadd.f32 %v860, %v935
    %v959 = vadd.f32 %v861, %v936
    %v960 = vadd.f32 %v862, %v926
    %v961 = vadd.f32 %v863, %v937
    %v962 = vadd.f32 %v864, %v938
    %v963 = vld [vmem:[#allocation9] sm:$0xff]
    %v964 = vld [vmem:[#allocation9 + $0x8] sm:$0xff]
    %v965 = vld [vmem:[#allocation9 + $0x10] sm:$0xff]
    %v966 = vld [vmem:[#allocation9 + $0x18] sm:$0xff]
    %979 = vrot.lane.b32.xlu0 %v559, 16
    %v980 = vpop.permute.xlu0 %979
    %981 = vrot.lane.b32.xlu0 %v560, 16
    %v982 = vpop.permute.xlu0 %981
    %983 = vrot.lane.b32.xlu0 %v561, 16
    %v984 = vpop.permute.xlu0 %983
    %985 = vrot.lane.b32.xlu0 %v562, 16
    %v986 = vpop.permute.xlu0 %985
    %987 = vrot.lane.b32.xlu0 %v563, 16
    %v988 = vpop.permute.xlu0 %987
    %989 = vrot.lane.b32.xlu0 %v564, 16
    %v990 = vpop.permute.xlu0 %989
    %991 = vrot.lane.b32.xlu0 %v565, 16
    %v992 = vpop.permute.xlu0 %991
    %993 = vrot.lane.b32.xlu0 %v566, 16
    %v994 = vpop.permute.xlu0 %993
    %995 = vrot.lane.b32.xlu0 %v567, 16
    %v996 = vpop.permute.xlu0 %995
    %997 = vrot.lane.b32.xlu0 %v568, 16
    %v998 = vpop.permute.xlu0 %997
    %999 = vrot.lane.b32.xlu0 %v569, 16
    %v1000 = vpop.permute.xlu0 %999
    %1001 = vrot.lane.b32.xlu0 %v570, 16
    %v1002 = vpop.permute.xlu0 %1001
    %v1003 = vsel %vm340, %v980, %v982
    %v1004 = vsel %vm340, %v982, %v984
    %v1005 = vsel %vm340, %v986, %v988
    %v1006 = vsel %vm340, %v988, %v990
    %v1007 = vsel %vm340, %v992, %v994
    %v1008 = vsel %vm340, %v994, %v996
    %v1009 = vsel %vm340, %v998, %v1000
    %v1010 = vsel %vm340, %v1000, %v1002
    %1031 = vrot.lane.b32.xlu0 %v755, 16
    %v1032 = vpop.permute.xlu0 %1031
    %1033 = vrot.lane.b32.xlu0 %v756, 16
    %v1034 = vpop.permute.xlu0 %1033
    %1035 = vrot.lane.b32.xlu0 %v757, 16
    %v1036 = vpop.permute.xlu0 %1035
    %1037 = vrot.lane.b32.xlu0 %v758, 16
    %v1038 = vpop.permute.xlu0 %1037
    %1039 = vrot.lane.b32.xlu0 %v759, 16
    %v1040 = vpop.permute.xlu0 %1039
    %1041 = vrot.lane.b32.xlu0 %v760, 16
    %v1042 = vpop.permute.xlu0 %1041
    %1043 = vrot.lane.b32.xlu0 %v761, 16
    %v1044 = vpop.permute.xlu0 %1043
    %1045 = vrot.lane.b32.xlu0 %v762, 16
    %v1046 = vpop.permute.xlu0 %1045
    %1047 = vrot.lane.b32.xlu0 %v763, 16
    %v1048 = vpop.permute.xlu0 %1047
    %1049 = vrot.lane.b32.xlu0 %v764, 16
    %v1050 = vpop.permute.xlu0 %1049
    %1051 = vrot.lane.b32.xlu0 %v765, 16
    %v1052 = vpop.permute.xlu0 %1051
    %1053 = vrot.lane.b32.xlu0 %v766, 16
    %v1054 = vpop.permute.xlu0 %1053
    %v1055 = vsel %vm340, %v1032, %v1034
    %v1056 = vsel %vm340, %v1034, %v1036
    %v1057 = vsel %vm340, %v1038, %v1040
    %v1058 = vsel %vm340, %v1040, %v1042
    %v1059 = vsel %vm340, %v1044, %v1046
    %v1060 = vsel %vm340, %v1046, %v1048
    %v1061 = vsel %vm340, %v1050, %v1052
    %v1062 = vsel %vm340, %v1052, %v1054
    %vm1071 = vcmask 261120
    %v1073 = vsel %vm1071, %v963, 0
    %v1076 = vsel %vm1071, %v964, 0
    %v1079 = vsel %vm1071, %v965, 0
    %v1082 = vsel %vm1071, %v966, 0
    %1084 = vmatprep.subr.mxu0 0.0
    %1085 = vmatpush1.msra.mxu0 0.0
    %1086 = vmatprep.subr.mxu0 0.0
    %1087 = vmatpush1.msra.mxu0 0.0
    %1088 = vmatprep.subr.mxu0 0.0
    %1089 = vmatpush1.msra.mxu0 0.0
    %1090 = vmatprep.subr.mxu0 0.0
    %1091 = vmatpush1.msra.mxu0 0.0
    %1092 = vmatprep.subr.mxu0 0.0
    %1093 = vmatpush1.msra.mxu0 0.0
    %1094 = vmatprep.subr.mxu0 0.0
    %1095 = vmatpush1.msra.mxu0 0.0
    %1096 = vmatprep.subr.mxu0 0.0
    %1097 = vmatpush1.msra.mxu0 0.0
    %1098 = vmatprep.subr.mxu0 0.0
    %1099 = vmatpush1.msra.mxu0 0.0
    %1100 = vmatprep.subr.mxu0 0.0
    %1101 = vmatpush1.msra.mxu0 0.0
    %1102 = vmatprep.subr.mxu0 0.0
    %1103 = vmatpush1.msra.mxu0 0.0
    %1104 = vmatprep.subr.mxu0 0.0
    %1105 = vmatpush1.msra.mxu0 0.0
    %1106 = vmatprep.subr.mxu0 0.0
    %1107 = vmatpush1.msra.mxu0 0.0
    %1108 = vmatprep.subr.mxu0 %v1010
    %1109 = vmatpush1.msra.mxu0 %v1009
    %1110 = vmatprep.subr.mxu0 %v1008
    %1111 = vmatpush1.msra.mxu0 %v1007
    %1112 = vmatprep.subr.mxu0 %v1006
    %1113 = vmatpush1.msra.mxu0 %v1005
    %1114 = vmatprep.subr.mxu0 %v1004
    %1115 = vmatpush1.msra.mxu0 %v1003
    %1116 = vmatprep.subr.mxu0 0.0
    %1117 = vmatpush2.msra.mxu0 0.0
    %1118 = vmatprep.subr.mxu0 0.0
    %1119 = vmatpush2.msra.mxu0 0.0
    %1120 = vmatprep.subr.mxu0 0.0
    %1121 = vmatpush2.msra.mxu0 0.0
    %1122 = vmatprep.subr.mxu0 0.0
    %1123 = vmatpush2.msra.mxu0 0.0
    %1124 = vmatprep.subr.mxu0 0.0
    %1125 = vmatpush2.msra.mxu0 0.0
    %1126 = vmatprep.subr.mxu0 0.0
    %1127 = vmatpush2.msra.mxu0 0.0
    %1128 = vmatprep.subr.mxu0 0.0
    %1129 = vmatpush2.msra.mxu0 0.0
    %1130 = vmatprep.subr.mxu0 0.0
    %1131 = vmatpush2.msra.mxu0 0.0
    %1132 = vmatprep.subr.mxu0 0.0
    %1133 = vmatpush2.msra.mxu0 0.0
    %1134 = vmatprep.subr.mxu0 0.0
    %1135 = vmatpush2.msra.mxu0 0.0
    %1136 = vmatprep.subr.mxu0 0.0
    %1137 = vmatpush2.msra.mxu0 0.0
    %1138 = vmatprep.subr.mxu0 0.0
    %1139 = vmatpush2.msra.mxu0 0.0
    %1140 = vmatprep.subr.mxu0 0.0
    %1141 = vmatpush2.msra.mxu0 0.0
    %1142 = vmatprep.subr.mxu0 0.0
    %1143 = vmatpush2.msra.mxu0 0.0
    %1144 = vmatprep.subr.mxu0 0.0
    %1145 = vmatpush2.msra.mxu0 0.0
    %1146 = vmatprep.subr.mxu0 0.0
    %1147 = vmatpush2.msra.mxu0 0.0
    %1148 = vmatprep.mubr.f32.mxu0 0.0
    %1149 = vmatmul.mubr.f32.gmra.mxu0 %v1073
    %v1150 = vpop.f32.mrf.mxu0
    %v1151 = vadd.f32 %v1055, %v1150
    %v1152 = vpop.f32.mrf.mxu0
    %v1153 = vadd.f32 %v1056, %v1152
    %1154 = vmatprep.mubr.f32.mxu0 0.0
    %1155 = vmatmul.mubr.f32.gmra.mxu0 %v1076
    %v1156 = vpop.f32.mrf.mxu0
    %v1157 = vadd.f32 %v1057, %v1156
    %v1158 = vpop.f32.mrf.mxu0
    %v1159 = vadd.f32 %v1058, %v1158
    %1160 = vmatprep.mubr.f32.mxu0 0.0
    %1161 = vmatmul.mubr.f32.gmra.mxu0 %v1079
    %v1162 = vpop.f32.mrf.mxu0
    %v1163 = vadd.f32 %v1059, %v1162
    %v1164 = vpop.f32.mrf.mxu0
    %v1165 = vadd.f32 %v1060, %v1164
    %1166 = vmatprep.mubr.f32.mxu0 0.0
    %1167 = vmatmul.mubr.f32.gmra.mxu0 %v1082
    %v1168 = vpop.f32.mrf.mxu0
    %v1169 = vadd.f32 %v1061, %v1168
    %v1170 = vpop.f32.mrf.mxu0
    %v1171 = vadd.f32 %v1062, %v1170
    %1172 = vdwg.mxu0
    %v1173 = vld [vmem:[%s6] sm:$0xff]
    %v1174 = vld [vmem:[%s6 + $0x8] sm:$0xff]
    %v1175 = vld [vmem:[%s6 + $0x10] sm:$0xff]
    %v1176 = vld [vmem:[%s6 + $0x18] sm:$0xff]
    %1189 = vrot.lane.b32.xlu0 %v951, 16
    %v1190 = vpop.permute.xlu0 %1189
    %1191 = vrot.lane.b32.xlu0 %v952, 16
    %v1192 = vpop.permute.xlu0 %1191
    %1193 = vrot.lane.b32.xlu0 %v953, 16
    %v1194 = vpop.permute.xlu0 %1193
    %1195 = vrot.lane.b32.xlu0 %v954, 16
    %v1196 = vpop.permute.xlu0 %1195
    %1197 = vrot.lane.b32.xlu0 %v955, 16
    %v1198 = vpop.permute.xlu0 %1197
    %1199 = vrot.lane.b32.xlu0 %v956, 16
    %v1200 = vpop.permute.xlu0 %1199
    %1201 = vrot.lane.b32.xlu0 %v957, 16
    %v1202 = vpop.permute.xlu0 %1201
    %1203 = vrot.lane.b32.xlu0 %v958, 16
    %v1204 = vpop.permute.xlu0 %1203
    %1205 = vrot.lane.b32.xlu0 %v959, 16
    %v1206 = vpop.permute.xlu0 %1205
    %1207 = vrot.lane.b32.xlu0 %v960, 16
    %v1208 = vpop.permute.xlu0 %1207
    %1209 = vrot.lane.b32.xlu0 %v961, 16
    %v1210 = vpop.permute.xlu0 %1209
    %1211 = vrot.lane.b32.xlu0 %v962, 16
    %v1212 = vpop.permute.xlu0 %1211
    %v1213 = vsel %vm340, %v1190, %v1192
    %v1214 = vsel %vm340, %v1192, %v1194
    %v1215 = vsel %vm340, %v1196, %v1198
    %v1216 = vsel %vm340, %v1198, %v1200
    %v1217 = vsel %vm340, %v1202, %v1204
    %v1218 = vsel %vm340, %v1204, %v1206
    %v1219 = vsel %vm340, %v1208, %v1210
    %v1220 = vsel %vm340, %v1210, %v1212
    %v1230 = vsel %vm1071, %v1173, 0
    %v1233 = vsel %vm1071, %v1174, 0
    %v1236 = vsel %vm1071, %v1175, 0
    %v1239 = vsel %vm1071, %v1176, 0
    %1241 = vmatprep.subr.mxu0 0.0
    %1242 = vmatpush1.msra.mxu0 0.0
    %1243 = vmatprep.subr.mxu0 0.0
    %1244 = vmatpush1.msra.mxu0 0.0
    %1245 = vmatprep.subr.mxu0 0.0
    %1246 = vmatpush1.msra.mxu0 0.0
    %1247 = vmatprep.subr.mxu0 0.0
    %1248 = vmatpush1.msra.mxu0 0.0
    %1249 = vmatprep.subr.mxu0 0.0
    %1250 = vmatpush1.msra.mxu0 0.0
    %1251 = vmatprep.subr.mxu0 0.0
    %1252 = vmatpush1.msra.mxu0 0.0
    %1253 = vmatprep.subr.mxu0 0.0
    %1254 = vmatpush1.msra.mxu0 0.0
    %1255 = vmatprep.subr.mxu0 0.0
    %1256 = vmatpush1.msra.mxu0 0.0
    %1257 = vmatprep.subr.mxu0 0.0
    %1258 = vmatpush1.msra.mxu0 0.0
    %1259 = vmatprep.subr.mxu0 0.0
    %1260 = vmatpush1.msra.mxu0 0.0
    %1261 = vmatprep.subr.mxu0 0.0
    %1262 = vmatpush1.msra.mxu0 0.0
    %1263 = vmatprep.subr.mxu0 0.0
    %1264 = vmatpush1.msra.mxu0 0.0
    %1265 = vmatprep.subr.mxu0 %v1220
    %1266 = vmatpush1.msra.mxu0 %v1219
    %1267 = vmatprep.subr.mxu0 %v1218
    %1268 = vmatpush1.msra.mxu0 %v1217
    %1269 = vmatprep.subr.mxu0 %v1216
    %1270 = vmatpush1.msra.mxu0 %v1215
    %1271 = vmatprep.subr.mxu0 %v1214
    %1272 = vmatpush1.msra.mxu0 %v1213
    %1273 = vmatprep.subr.mxu0 0.0
    %1274 = vmatpush2.msra.mxu0 0.0
    %1275 = vmatprep.subr.mxu0 0.0
    %1276 = vmatpush2.msra.mxu0 0.0
    %1277 = vmatprep.subr.mxu0 0.0
    %1278 = vmatpush2.msra.mxu0 0.0
    %1279 = vmatprep.subr.mxu0 0.0
    %1280 = vmatpush2.msra.mxu0 0.0
    %1281 = vmatprep.subr.mxu0 0.0
    %1282 = vmatpush2.msra.mxu0 0.0
    %1283 = vmatprep.subr.mxu0 0.0
    %1284 = vmatpush2.msra.mxu0 0.0
    %1285 = vmatprep.subr.mxu0 0.0
    %1286 = vmatpush2.msra.mxu0 0.0
    %1287 = vmatprep.subr.mxu0 0.0
    %1288 = vmatpush2.msra.mxu0 0.0
    %1289 = vmatprep.subr.mxu0 0.0
    %1290 = vmatpush2.msra.mxu0 0.0
    %1291 = vmatprep.subr.mxu0 0.0
    %1292 = vmatpush2.msra.mxu0 0.0
    %1293 = vmatprep.subr.mxu0 0.0
    %1294 = vmatpush2.msra.mxu0 0.0
    %1295 = vmatprep.subr.mxu0 0.0
    %1296 = vmatpush2.msra.mxu0 0.0
    %1297 = vmatprep.subr.mxu0 0.0
    %1298 = vmatpush2.msra.mxu0 0.0
    %1299 = vmatprep.subr.mxu0 0.0
    %1300 = vmatpush2.msra.mxu0 0.0
    %1301 = vmatprep.subr.mxu0 0.0
    %1302 = vmatpush2.msra.mxu0 0.0
    %1303 = vmatprep.subr.mxu0 0.0
    %1304 = vmatpush2.msra.mxu0 0.0
    %1305 = vmatprep.mubr.f32.mxu0 0.0
    %1306 = vmatmul.mubr.f32.gmra.mxu0 %v1230
    %v1307 = vpop.f32.mrf.mxu0
    %v1308 = vadd.f32 0.0, %v1307
    %v1309 = vpop.f32.mrf.mxu0
    %v1310 = vadd.f32 0.0, %v1309
    %1311 = vmatprep.mubr.f32.mxu0 0.0
    %1312 = vmatmul.mubr.f32.gmra.mxu0 %v1233
    %v1313 = vpop.f32.mrf.mxu0
    %v1314 = vadd.f32 0.0, %v1313
    %v1315 = vpop.f32.mrf.mxu0
    %v1316 = vadd.f32 0.0, %v1315
    %1317 = vmatprep.mubr.f32.mxu0 0.0
    %1318 = vmatmul.mubr.f32.gmra.mxu0 %v1236
    %v1319 = vpop.f32.mrf.mxu0
    %v1320 = vadd.f32 0.0, %v1319
    %v1321 = vpop.f32.mrf.mxu0
    %v1322 = vadd.f32 0.0, %v1321
    %1323 = vmatprep.mubr.f32.mxu0 0.0
    %1324 = vmatmul.mubr.f32.gmra.mxu0 %v1239
    %v1325 = vpop.f32.mrf.mxu0
    %v1326 = vadd.f32 0.0, %v1325
    %v1327 = vpop.f32.mrf.mxu0
    %v1328 = vadd.f32 0.0, %v1327
    %1329 = vdwg.mxu0
    %v1330 = vadd.f32 %v1151, %v1308
    %v1331 = vadd.f32 %v1153, %v1310
    %v1332 = vadd.f32 %v1157, %v1314
    %v1333 = vadd.f32 %v1159, %v1316
    %v1334 = vadd.f32 %v1163, %v1320
    %v1335 = vadd.f32 %v1165, %v1322
    %v1336 = vadd.f32 %v1169, %v1326
    %v1337 = vadd.f32 %v1171, %v1328
    %v1338 = vld [vmem:[#allocation8] sm:$0x3]
    %v1340 = vlaneseq
    %v1341 = vshrl.u32 %v1340, 7
    %v1342 = vsub.s32 0, %v1341
    %v1343 = vrot.slane %v1338, %v1342
    %v1344 = vlaneseq
    %v1345 = vshrl.u32 %v1344, 7
    %v1346 = vsub.s32 1, %v1345
    %v1347 = vrot.slane %v1338, %v1346
    %v1350 = vadd.f32 %v1330, %v1343
    %v1351 = vadd.f32 %v1331, %v1347
    %v1352 = vadd.f32 %v1332, %v1343
    %v1353 = vadd.f32 %v1333, %v1347
    %v1354 = vadd.f32 %v1334, %v1343
    %v1355 = vadd.f32 %v1335, %v1347
    %v1356 = vadd.f32 %v1336, %v1343
    %v1357 = vadd.f32 %v1337, %v1347
    %v1358 = vadd.f32 %v1350, 3.0
    %v1359 = vadd.f32 %v1351, 3.0
    %v1360 = vadd.f32 %v1352, 3.0
    %v1361 = vadd.f32 %v1353, 3.0
    %v1362 = vadd.f32 %v1354, 3.0
    %v1363 = vadd.f32 %v1355, 3.0
    %v1364 = vadd.f32 %v1356, 3.0
    %v1365 = vadd.f32 %v1357, 3.0
    %v1366 = vmax.f32 %v1358, 0.0
    %v1367 = vmax.f32 %v1359, 0.0
    %v1368 = vmax.f32 %v1360, 0.0
    %v1369 = vmax.f32 %v1361, 0.0
    %v1370 = vmax.f32 %v1362, 0.0
    %v1371 = vmax.f32 %v1363, 0.0
    %v1372 = vmax.f32 %v1364, 0.0
    %v1373 = vmax.f32 %v1365, 0.0
    %v1374 = vmin.f32 %v1366, 6.0
    %v1375 = vmin.f32 %v1367, 6.0
    %v1376 = vmin.f32 %v1368, 6.0
    %v1377 = vmin.f32 %v1369, 6.0
    %v1378 = vmin.f32 %v1370, 6.0
    %v1379 = vmin.f32 %v1371, 6.0
    %v1380 = vmin.f32 %v1372, 6.0
    %v1381 = vmin.f32 %v1373, 6.0
    %v1382 = vmul.f32 %v1350, %v1374
    %v1383 = vmul.f32 %v1351, %v1375
    %v1384 = vmul.f32 %v1352, %v1376
    %v1385 = vmul.f32 %v1353, %v1377
    %v1386 = vmul.f32 %v1354, %v1378
    %v1387 = vmul.f32 %v1355, %v1379
    %v1388 = vmul.f32 %v1356, %v1380
    %v1389 = vmul.f32 %v1357, %v1381
    %v1390 = vmul.f32 %v1382, 0.16666667
    %v1391 = vmul.f32 %v1383, 0.16666667
    %v1392 = vmul.f32 %v1384, 0.16666667
    %v1393 = vmul.f32 %v1385, 0.16666667
    %v1394 = vmul.f32 %v1386, 0.16666667
    %v1395 = vmul.f32 %v1387, 0.16666667
    %v1396 = vmul.f32 %v1388, 0.16666667
    %v1397 = vmul.f32 %v1389, 0.16666667
    %v1398 = vld [vmem:[#allocation11] sm:$0x3]
    %v1400 = vsel %vm1071, %v1398, 0
    %1402 = vmatprep.subr.mxu0 0.0
    %1403 = vmatpush1.msra.mxu0 0.0
    %1404 = vmatprep.subr.mxu0 0.0
    %1405 = vmatpush1.msra.mxu0 0.0
    %1406 = vmatprep.subr.mxu0 0.0
    %1407 = vmatpush1.msra.mxu0 0.0
    %1408 = vmatprep.subr.mxu0 0.0
    %1409 = vmatpush1.msra.mxu0 0.0
    %1410 = vmatprep.subr.mxu0 0.0
    %1411 = vmatpush1.msra.mxu0 0.0
    %1412 = vmatprep.subr.mxu0 0.0
    %1413 = vmatpush1.msra.mxu0 0.0
    %1414 = vmatprep.subr.mxu0 0.0
    %1415 = vmatpush1.msra.mxu0 0.0
    %1416 = vmatprep.subr.mxu0 0.0
    %1417 = vmatpush1.msra.mxu0 0.0
    %1418 = vmatprep.subr.mxu0 0.0
    %1419 = vmatpush1.msra.mxu0 0.0
    %1420 = vmatprep.subr.mxu0 0.0
    %1421 = vmatpush1.msra.mxu0 0.0
    %1422 = vmatprep.subr.mxu0 0.0
    %1423 = vmatpush1.msra.mxu0 0.0
    %1424 = vmatprep.subr.mxu0 0.0
    %1425 = vmatpush1.msra.mxu0 0.0
    %1426 = vmatprep.subr.mxu0 %v1397
    %1427 = vmatpush1.msra.mxu0 %v1396
    %1428 = vmatprep.subr.mxu0 %v1395
    %1429 = vmatpush1.msra.mxu0 %v1394
    %1430 = vmatprep.subr.mxu0 %v1393
    %1431 = vmatpush1.msra.mxu0 %v1392
    %1432 = vmatprep.subr.mxu0 %v1391
    %1433 = vmatpush1.msra.mxu0 %v1390
    %1434 = vmatprep.subr.mxu0 0.0
    %1435 = vmatpush2.msra.mxu0 0.0
    %1436 = vmatprep.subr.mxu0 0.0
    %1437 = vmatpush2.msra.mxu0 0.0
    %1438 = vmatprep.subr.mxu0 0.0
    %1439 = vmatpush2.msra.mxu0 0.0
    %1440 = vmatprep.subr.mxu0 0.0
    %1441 = vmatpush2.msra.mxu0 0.0
    %1442 = vmatprep.subr.mxu0 0.0
    %1443 = vmatpush2.msra.mxu0 0.0
    %1444 = vmatprep.subr.mxu0 0.0
    %1445 = vmatpush2.msra.mxu0 0.0
    %1446 = vmatprep.subr.mxu0 0.0
    %1447 = vmatpush2.msra.mxu0 0.0
    %1448 = vmatprep.subr.mxu0 0.0
    %1449 = vmatpush2.msra.mxu0 0.0
    %1450 = vmatprep.subr.mxu0 0.0
    %1451 = vmatpush2.msra.mxu0 0.0
    %1452 = vmatprep.subr.mxu0 0.0
    %1453 = vmatpush2.msra.mxu0 0.0
    %1454 = vmatprep.subr.mxu0 0.0
    %1455 = vmatpush2.msra.mxu0 0.0
    %1456 = vmatprep.subr.mxu0 0.0
    %1457 = vmatpush2.msra.mxu0 0.0
    %1458 = vmatprep.subr.mxu0 0.0
    %1459 = vmatpush2.msra.mxu0 0.0
    %1460 = vmatprep.subr.mxu0 0.0
    %1461 = vmatpush2.msra.mxu0 0.0
    %1462 = vmatprep.subr.mxu0 0.0
    %1463 = vmatpush2.msra.mxu0 0.0
    %1464 = vmatprep.subr.mxu0 0.0
    %1465 = vmatpush2.msra.mxu0 0.0
    %1466 = vmatprep.mubr.f32.mxu0 0.0
    %1467 = vmatmul.mubr.f32.gmra.mxu0 %v1400
    %v1468 = vpop.f32.mrf.mxu0
    %v1469 = vadd.f32 0.0, %v1468
    %v1470 = vpop.f32.mrf.mxu0
    %v1471 = vadd.f32 0.0, %v1470
    %1472 = vdwg.mxu0
    %v1473 = vld [vmem:[%s8] sm:$0xff]
    %v1474 = vld [vmem:[%s8 + $0x8] sm:$0xff]
    %v1475 = vld [vmem:[%s8 + $0x10] sm:$0xff]
    %v1476 = vld [vmem:[%s8 + $0x18] sm:$0xff]
    %v1477 = vld [vmem:[%s8 + $0x20] sm:$0xff]
    %v1478 = vld [vmem:[%s8 + $0x28] sm:$0xff]
    %v1479 = vld [vmem:[%s8 + $0x30] sm:$0xff]
    %v1480 = vld [vmem:[%s8 + $0x38] sm:$0xff]
    %v1481 = vld [vmem:[%s8 + $0x40] sm:$0xff]
    %v1482 = vld [vmem:[%s8 + $0x48] sm:$0xff]
    %v1483 = vld [vmem:[%s8 + $0x50] sm:$0xff]
    %v1484 = vld [vmem:[%s8 + $0x58] sm:$0xff]
    %v1485 = vld [vmem:[%s8 + $0x60] sm:$0xff]
    %v1486 = vld [vmem:[%s8 + $0x68] sm:$0xff]
    %v1487 = vld [vmem:[%s8 + $0x70] sm:$0xff]
    %v1488 = vld [vmem:[%s8 + $0x78] sm:$0xff]
    %v1489 = vld [vmem:[%s8 + $0x80] sm:$0xff]
    %v1490 = vld [vmem:[%s8 + $0x88] sm:$0xff]
    %v1491 = vld [vmem:[%s8 + $0x90] sm:$0xff]
    %v1492 = vld [vmem:[%s8 + $0x98] sm:$0xff]
    %v1493 = vld [vmem:[%s8 + $0xa0] sm:$0xff]
    %v1494 = vld [vmem:[%s8 + $0xa8] sm:$0xff]
    %v1495 = vld [vmem:[%s8 + $0xb0] sm:$0xff]
    %v1496 = vld [vmem:[%s8 + $0xb8] sm:$0xff]
    %v1497 = vld [vmem:[%s8 + $0xc0] sm:$0xff]
    %v1498 = vld [vmem:[%s8 + $0xc8] sm:$0xff]
    %v1499 = vld [vmem:[%s8 + $0xd0] sm:$0xff]
    %v1500 = vld [vmem:[%s8 + $0xd8] sm:$0xff]
    %v1501 = vld [vmem:[%s8 + $0xe0] sm:$0xff]
    %v1502 = vld [vmem:[%s8 + $0xe8] sm:$0xff]
    %v1503 = vld [vmem:[%s8 + $0xf0] sm:$0xff]
    %v1504 = vld [vmem:[%s8 + $0xf8] sm:$0xff]
    %1505 = vmatprep.subr.mxu0 0.0
    %1506 = vmatpush1.msra.mxu0 %v1488
    %1507 = vmatprep.subr.mxu0 0.0
    %1508 = vmatpush1.msra.mxu0 %v1487
    %1509 = vmatprep.subr.mxu0 0.0
    %1510 = vmatpush1.msra.mxu0 %v1486
    %1511 = vmatprep.subr.mxu0 0.0
    %1512 = vmatpush1.msra.mxu0 %v1485
    %1513 = vmatprep.subr.mxu0 0.0
    %1514 = vmatpush1.msra.mxu0 %v1484
    %1515 = vmatprep.subr.mxu0 0.0
    %1516 = vmatpush1.msra.mxu0 %v1483
    %1517 = vmatprep.subr.mxu0 0.0
    %1518 = vmatpush1.msra.mxu0 %v1482
    %1519 = vmatprep.subr.mxu0 0.0
    %1520 = vmatpush1.msra.mxu0 %v1481
    %1521 = vmatprep.subr.mxu0 0.0
    %1522 = vmatpush1.msra.mxu0 %v1480
    %1523 = vmatprep.subr.mxu0 0.0
    %1524 = vmatpush1.msra.mxu0 %v1479
    %1525 = vmatprep.subr.mxu0 0.0
    %1526 = vmatpush1.msra.mxu0 %v1478
    %1527 = vmatprep.subr.mxu0 0.0
    %1528 = vmatpush1.msra.mxu0 %v1477
    %1529 = vmatprep.subr.mxu0 0.0
    %1530 = vmatpush1.msra.mxu0 %v1476
    %1531 = vmatprep.subr.mxu0 0.0
    %1532 = vmatpush1.msra.mxu0 %v1475
    %1533 = vmatprep.subr.mxu0 0.0
    %1534 = vmatpush1.msra.mxu0 %v1474
    %1535 = vmatprep.subr.mxu0 0.0
    %1536 = vmatpush1.msra.mxu0 %v1473
    %1537 = vmatprep.subr.mxu0 0.0
    %1538 = vmatpush2.msra.mxu0 %v1504
    %1539 = vmatprep.subr.mxu0 0.0
    %1540 = vmatpush2.msra.mxu0 %v1503
    %1541 = vmatprep.subr.mxu0 0.0
    %1542 = vmatpush2.msra.mxu0 %v1502
    %1543 = vmatprep.subr.mxu0 0.0
    %1544 = vmatpush2.msra.mxu0 %v1501
    %1545 = vmatprep.subr.mxu0 0.0
    %1546 = vmatpush2.msra.mxu0 %v1500
    %1547 = vmatprep.subr.mxu0 0.0
    %1548 = vmatpush2.msra.mxu0 %v1499
    %1549 = vmatprep.subr.mxu0 0.0
    %1550 = vmatpush2.msra.mxu0 %v1498
    %1551 = vmatprep.subr.mxu0 0.0
    %1552 = vmatpush2.msra.mxu0 %v1497
    %1553 = vmatprep.subr.mxu0 0.0
    %1554 = vmatpush2.msra.mxu0 %v1496
    %1555 = vmatprep.subr.mxu0 0.0
    %1556 = vmatpush2.msra.mxu0 %v1495
    %1557 = vmatprep.subr.mxu0 0.0
    %1558 = vmatpush2.msra.mxu0 %v1494
    %1559 = vmatprep.subr.mxu0 0.0
    %1560 = vmatpush2.msra.mxu0 %v1493
    %1561 = vmatprep.subr.mxu0 0.0
    %1562 = vmatpush2.msra.mxu0 %v1492
    %1563 = vmatprep.subr.mxu0 0.0
    %1564 = vmatpush2.msra.mxu0 %v1491
    %1565 = vmatprep.subr.mxu0 0.0
    %1566 = vmatpush2.msra.mxu0 %v1490
    %1567 = vmatprep.subr.mxu0 0.0
    %1568 = vmatpush2.msra.mxu0 %v1489
    %1569 = vmatprep.mubr.f32.mxu0 %v1471
    %1570 = vmatmul.mubr.f32.gmra.mxu0 %v1469
    %v1571 = vpop.f32.mrf.mxu0
    %v1572 = vadd.f32 0.0, %v1571
    %v1573 = vpop.f32.mrf.mxu0
    %1574 = vdwg.mxu0
    %v1575 = vld [vmem:[%s9] sm:$0xff]
    %v1576 = vld [vmem:[%s9 + $0x8] sm:$0xff]
    %v1577 = vld [vmem:[#allocation12] sm:$0x1]
    %v1579 = vlaneseq
    %v1580 = vshrl.u32 %v1579, 7
    %v1581 = vsub.s32 0, %v1580
    %v1582 = vrot.slane %v1577, %v1581
    %v1585 = vsel %vm340, %v1572, 0
    %1587 = vmatprep.subr.mxu0 0.0
    %1588 = vmatpush1.msra.mxu0 0.0
    %1589 = vmatprep.subr.mxu0 0.0
    %1590 = vmatpush1.msra.mxu0 0.0
    %1591 = vmatprep.subr.mxu0 0.0
    %1592 = vmatpush1.msra.mxu0 0.0
    %1593 = vmatprep.subr.mxu0 0.0
    %1594 = vmatpush1.msra.mxu0 0.0
    %1595 = vmatprep.subr.mxu0 0.0
    %1596 = vmatpush1.msra.mxu0 0.0
    %1597 = vmatprep.subr.mxu0 0.0
    %1598 = vmatpush1.msra.mxu0 0.0
    %1599 = vmatprep.subr.mxu0 0.0
    %1600 = vmatpush1.msra.mxu0 0.0
    %1601 = vmatprep.subr.mxu0 0.0
    %1602 = vmatpush1.msra.mxu0 0.0
    %1603 = vmatprep.subr.mxu0 0.0
    %1604 = vmatpush1.msra.mxu0 0.0
    %1605 = vmatprep.subr.mxu0 0.0
    %1606 = vmatpush1.msra.mxu0 0.0
    %1607 = vmatprep.subr.mxu0 0.0
    %1608 = vmatpush1.msra.mxu0 0.0
    %1609 = vmatprep.subr.mxu0 0.0
    %1610 = vmatpush1.msra.mxu0 0.0
    %1611 = vmatprep.subr.mxu0 0.0
    %1612 = vmatpush1.msra.mxu0 0.0
    %1613 = vmatprep.subr.mxu0 0.0
    %1614 = vmatpush1.msra.mxu0 0.0
    %1615 = vmatprep.subr.mxu0 0.0
    %1616 = vmatpush1.msra.mxu0 %v1576
    %1617 = vmatprep.subr.mxu0 0.0
    %1618 = vmatpush1.msra.mxu0 %v1575
    %1619 = vmatprep.subr.mxu0 0.0
    %1620 = vmatpush2.msra.mxu0 0.0
    %1621 = vmatprep.subr.mxu0 0.0
    %1622 = vmatpush2.msra.mxu0 0.0
    %1623 = vmatprep.subr.mxu0 0.0
    %1624 = vmatpush2.msra.mxu0 0.0
    %1625 = vmatprep.subr.mxu0 0.0
    %1626 = vmatpush2.msra.mxu0 0.0
    %1627 = vmatprep.subr.mxu0 0.0
    %1628 = vmatpush2.msra.mxu0 0.0
    %1629 = vmatprep.subr.mxu0 0.0
    %1630 = vmatpush2.msra.mxu0 0.0
    %1631 = vmatprep.subr.mxu0 0.0
    %1632 = vmatpush2.msra.mxu0 0.0
    %1633 = vmatprep.subr.mxu0 0.0
    %1634 = vmatpush2.msra.mxu0 0.0
    %1635 = vmatprep.subr.mxu0 0.0
    %1636 = vmatpush2.msra.mxu0 0.0
    %1637 = vmatprep.subr.mxu0 0.0
    %1638 = vmatpush2.msra.mxu0 0.0
    %1639 = vmatprep.subr.mxu0 0.0
    %1640 = vmatpush2.msra.mxu0 0.0
    %1641 = vmatprep.subr.mxu0 0.0
    %1642 = vmatpush2.msra.mxu0 0.0
    %1643 = vmatprep.subr.mxu0 0.0
    %1644 = vmatpush2.msra.mxu0 0.0
    %1645 = vmatprep.subr.mxu0 0.0
    %1646 = vmatpush2.msra.mxu0 0.0
    %1647 = vmatprep.subr.mxu0 0.0
    %1648 = vmatpush2.msra.mxu0 0.0
    %1649 = vmatprep.subr.mxu0 0.0
    %1650 = vmatpush2.msra.mxu0 0.0
    %1651 = vmatprep.mubr.f32.mxu0 0.0
    %1652 = vmatmul.mubr.f32.gmra.mxu0 %v1585
    %v1653 = vpop.f32.mrf.mxu0
    %v1654 = vadd.f32 %v1582, %v1653
    %v1655 = vpop.f32.mrf.mxu0
    %1656 = vdwg.mxu0
    %v1657 = vmax.f32 %v1654, 0.0
    %v1658 = vld [vmem:[%s11] sm:$0xf]
    %v1659 = vld [vmem:[%s12] sm:$0x1]
    %v1661 = vlaneseq
    %v1662 = vshrl.u32 %v1661, 7
    %v1663 = vsub.s32 0, %v1662
    %v1664 = vrot.slane %v1659, %v1663
    %vm1666 = vcmask 31744
    %v1668 = vsel %vm1666, %v1657, 0
    %vm1670 = vcmask 1043456
    %v1672 = vsel %vm1670, %v1658, 0
    %1674 = vmatprep.subr.mxu0 0.0
    %1675 = vmatpush1.msra.mxu0 0.0
    %1676 = vmatprep.subr.mxu0 0.0
    %1677 = vmatpush1.msra.mxu0 0.0
    %1678 = vmatprep.subr.mxu0 0.0
    %1679 = vmatpush1.msra.mxu0 0.0
    %1680 = vmatprep.subr.mxu0 0.0
    %1681 = vmatpush1.msra.mxu0 0.0
    %1682 = vmatprep.subr.mxu0 0.0
    %1683 = vmatpush1.msra.mxu0 0.0
    %1684 = vmatprep.subr.mxu0 0.0
    %1685 = vmatpush1.msra.mxu0 0.0
    %1686 = vmatprep.subr.mxu0 0.0
    %1687 = vmatpush1.msra.mxu0 0.0
    %1688 = vmatprep.subr.mxu0 0.0
    %1689 = vmatpush1.msra.mxu0 0.0
    %1690 = vmatprep.subr.mxu0 0.0
    %1691 = vmatpush1.msra.mxu0 0.0
    %1692 = vmatprep.subr.mxu0 0.0
    %1693 = vmatpush1.msra.mxu0 0.0
    %1694 = vmatprep.subr.mxu0 0.0
    %1695 = vmatpush1.msra.mxu0 0.0
    %1696 = vmatprep.subr.mxu0 0.0
    %1697 = vmatpush1.msra.mxu0 0.0
    %1698 = vmatprep.subr.mxu0 0.0
    %1699 = vmatpush1.msra.mxu0 0.0
    %1700 = vmatprep.subr.mxu0 0.0
    %1701 = vmatpush1.msra.mxu0 0.0
    %1702 = vmatprep.subr.mxu0 0.0
    %1703 = vmatpush1.msra.mxu0 0.0
    %1704 = vmatprep.subr.mxu0 0.0
    %1705 = vmatpush1.msra.mxu0 %v1672
    %1706 = vmatprep.subr.mxu0 0.0
    %1707 = vmatpush2.msra.mxu0 0.0
    %1708 = vmatprep.subr.mxu0 0.0
    %1709 = vmatpush2.msra.mxu0 0.0
    %1710 = vmatprep.subr.mxu0 0.0
    %1711 = vmatpush2.msra.mxu0 0.0
    %1712 = vmatprep.subr.mxu0 0.0
    %1713 = vmatpush2.msra.mxu0 0.0
    %1714 = vmatprep.subr.mxu0 0.0
    %1715 = vmatpush2.msra.mxu0 0.0
    %1716 = vmatprep.subr.mxu0 0.0
    %1717 = vmatpush2.msra.mxu0 0.0
    %1718 = vmatprep.subr.mxu0 0.0
    %1719 = vmatpush2.msra.mxu0 0.0
    %1720 = vmatprep.subr.mxu0 0.0
    %1721 = vmatpush2.msra.mxu0 0.0
    %1722 = vmatprep.subr.mxu0 0.0
    %1723 = vmatpush2.msra.mxu0 0.0
    %1724 = vmatprep.subr.mxu0 0.0
    %1725 = vmatpush2.msra.mxu0 0.0
    %1726 = vmatprep.subr.mxu0 0.0
    %1727 = vmatpush2.msra.mxu0 0.0
    %1728 = vmatprep.subr.mxu0 0.0
    %1729 = vmatpush2.msra.mxu0 0.0
    %1730 = vmatprep.subr.mxu0 0.0
    %1731 = vmatpush2.msra.mxu0 0.0
    %1732 = vmatprep.subr.mxu0 0.0
    %1733 = vmatpush2.msra.mxu0 0.0
    %1734 = vmatprep.subr.mxu0 0.0
    %1735 = vmatpush2.msra.mxu0 0.0
    %1736 = vmatprep.subr.mxu0 0.0
    %1737 = vmatpush2.msra.mxu0 0.0
    %1738 = vmatprep.mubr.f32.mxu0 0.0
    %1739 = vmatmul.mubr.f32.gmra.mxu0 %v1668
    %v1740 = vpop.f32.mrf.mxu0
    %v1741 = vadd.f32 %v1664, %v1740
    %v1742 = vpop.f32.mrf.mxu0
    %1743 = vdwg.mxu0
    %v1744 = vadd.f32 %v1741, 3.0
    %v1745 = vmax.f32 %v1744, 0.0
    %v1746 = vmin.f32 %v1745, 6.0
    %v1747 = vmul.f32 %v1746, 0.16666667
    %v1748 = vld [vmem:[%s14] sm:$0xff]
    %v1749 = vld [vmem:[%s14 + $0x8] sm:$0xff]
    %v1750 = vld [vmem:[%s14 + $0x10] sm:$0xff]
    %v1751 = vld [vmem:[%s14 + $0x18] sm:$0xff]
    %v1752 = vld [vmem:[#allocation14] sm:$0xff]
    %v1753 = vld [vmem:[#allocation14 + $0x8] sm:$0xff]
    %v1754 = vld [vmem:[#allocation14 + $0x10] sm:$0xff]
    %v1755 = vld [vmem:[#allocation14 + $0x18] sm:$0xff]
    %v1757 = vsel %vm340, %v1747, 0
    %1759 = vmatprep.subr.mxu0 0.0
    %1760 = vmatpush1.msra.mxu0 0.0
    %1761 = vmatprep.subr.mxu0 0.0
    %1762 = vmatpush1.msra.mxu0 0.0
    %1763 = vmatprep.subr.mxu0 0.0
    %1764 = vmatpush1.msra.mxu0 0.0
    %1765 = vmatprep.subr.mxu0 0.0
    %1766 = vmatpush1.msra.mxu0 0.0
    %1767 = vmatprep.subr.mxu0 0.0
    %1768 = vmatpush1.msra.mxu0 0.0
    %1769 = vmatprep.subr.mxu0 0.0
    %1770 = vmatpush1.msra.mxu0 0.0
    %1771 = vmatprep.subr.mxu0 0.0
    %1772 = vmatpush1.msra.mxu0 0.0
    %1773 = vmatprep.subr.mxu0 0.0
    %1774 = vmatpush1.msra.mxu0 0.0
    %1775 = vmatprep.subr.mxu0 0.0
    %1776 = vmatpush1.msra.mxu0 0.0
    %1777 = vmatprep.subr.mxu0 0.0
    %1778 = vmatpush1.msra.mxu0 0.0
    %1779 = vmatprep.subr.mxu0 0.0
    %1780 = vmatpush1.msra.mxu0 0.0
    %1781 = vmatprep.subr.mxu0 0.0
    %1782 = vmatpush1.msra.mxu0 0.0
    %1783 = vmatprep.subr.mxu0 0.0
    %1784 = vmatpush1.msra.mxu0 0.0
    %1785 = vmatprep.subr.mxu0 0.0
    %1786 = vmatpush1.msra.mxu0 0.0
    %1787 = vmatprep.subr.mxu0 %v1755
    %1788 = vmatpush1.msra.mxu0 %v1754
    %1789 = vmatprep.subr.mxu0 %v1753
    %1790 = vmatpush1.msra.mxu0 %v1752
    %1791 = vmatprep.subr.mxu0 0.0
    %1792 = vmatpush2.msra.mxu0 0.0
    %1793 = vmatprep.subr.mxu0 0.0
    %1794 = vmatpush2.msra.mxu0 0.0
    %1795 = vmatprep.subr.mxu0 0.0
    %1796 = vmatpush2.msra.mxu0 0.0
    %1797 = vmatprep.subr.mxu0 0.0
    %1798 = vmatpush2.msra.mxu0 0.0
    %1799 = vmatprep.subr.mxu0 0.0
    %1800 = vmatpush2.msra.mxu0 0.0
    %1801 = vmatprep.subr.mxu0 0.0
    %1802 = vmatpush2.msra.mxu0 0.0
    %1803 = vmatprep.subr.mxu0 0.0
    %1804 = vmatpush2.msra.mxu0 0.0
    %1805 = vmatprep.subr.mxu0 0.0
    %1806 = vmatpush2.msra.mxu0 0.0
    %1807 = vmatprep.subr.mxu0 0.0
    %1808 = vmatpush2.msra.mxu0 0.0
    %1809 = vmatprep.subr.mxu0 0.0
    %1810 = vmatpush2.msra.mxu0 0.0
    %1811 = vmatprep.subr.mxu0 0.0
    %1812 = vmatpush2.msra.mxu0 0.0
    %1813 = vmatprep.subr.mxu0 0.0
    %1814 = vmatpush2.msra.mxu0 0.0
    %1815 = vmatprep.subr.mxu0 0.0
    %1816 = vmatpush2.msra.mxu0 0.0
    %1817 = vmatprep.subr.mxu0 0.0
    %1818 = vmatpush2.msra.mxu0 0.0
    %1819 = vmatprep.subr.mxu0 0.0
    %1820 = vmatpush2.msra.mxu0 0.0
    %1821 = vmatprep.subr.mxu0 0.0
    %1822 = vmatpush2.msra.mxu0 0.0
    %1823 = vmatprep.mubr.f32.mxu0 0.0
    %1824 = vmatmul.mubr.f32.gmra.mxu0 %v1757
    %v1825 = vpop.f32.mrf.mxu0
    %v1826 = vadd.f32 0.0, %v1825
    %v1827 = vpop.f32.mrf.mxu0
    %v1828 = vadd.f32 0.0, %v1827
    %1829 = vdwg.mxu0
    %vm1830 = vcmask 15360
    %v1832 = vsel %vm1830, %v1748, 0
    %v1835 = vsel %vm1830, %v1749, 0
    %v1838 = vsel %vm1830, %v1750, 0
    %v1841 = vsel %vm1830, %v1751, 0
    %vm1843 = vcmask 1041408
    %v1845 = vsel %vm1843, %v1826, 0
    %v1848 = vsel %vm1843, %v1828, 0
    %1850 = vmatprep.subr.mxu0 0.0
    %1851 = vmatpush1.msra.mxu0 0.0
    %1852 = vmatprep.subr.mxu0 0.0
    %1853 = vmatpush1.msra.mxu0 0.0
    %1854 = vmatprep.subr.mxu0 0.0
    %1855 = vmatpush1.msra.mxu0 0.0
    %1856 = vmatprep.subr.mxu0 0.0
    %1857 = vmatpush1.msra.mxu0 0.0
    %1858 = vmatprep.subr.mxu0 0.0
    %1859 = vmatpush1.msra.mxu0 0.0
    %1860 = vmatprep.subr.mxu0 0.0
    %1861 = vmatpush1.msra.mxu0 0.0
    %1862 = vmatprep.subr.mxu0 0.0
    %1863 = vmatpush1.msra.mxu0 0.0
    %1864 = vmatprep.subr.mxu0 0.0
    %1865 = vmatpush1.msra.mxu0 0.0
    %1866 = vmatprep.subr.mxu0 0.0
    %1867 = vmatpush1.msra.mxu0 0.0
    %1868 = vmatprep.subr.mxu0 0.0
    %1869 = vmatpush1.msra.mxu0 0.0
    %1870 = vmatprep.subr.mxu0 0.0
    %1871 = vmatpush1.msra.mxu0 0.0
    %1872 = vmatprep.subr.mxu0 0.0
    %1873 = vmatpush1.msra.mxu0 0.0
    %1874 = vmatprep.subr.mxu0 0.0
    %1875 = vmatpush1.msra.mxu0 0.0
    %1876 = vmatprep.subr.mxu0 0.0
    %1877 = vmatpush1.msra.mxu0 0.0
    %1878 = vmatprep.subr.mxu0 0.0
    %1879 = vmatpush1.msra.mxu0 0.0
    %1880 = vmatprep.subr.mxu0 %v1848
    %1881 = vmatpush1.msra.mxu0 %v1845
    %1882 = vmatprep.subr.mxu0 0.0
    %1883 = vmatpush2.msra.mxu0 0.0
    %1884 = vmatprep.subr.mxu0 0.0
    %1885 = vmatpush2.msra.mxu0 0.0
    %1886 = vmatprep.subr.mxu0 0.0
    %1887 = vmatpush2.msra.mxu0 0.0
    %1888 = vmatprep.subr.mxu0 0.0
    %1889 = vmatpush2.msra.mxu0 0.0
    %1890 = vmatprep.subr.mxu0 0.0
    %1891 = vmatpush2.msra.mxu0 0.0
    %1892 = vmatprep.subr.mxu0 0.0
    %1893 = vmatpush2.msra.mxu0 0.0
    %1894 = vmatprep.subr.mxu0 0.0
    %1895 = vmatpush2.msra.mxu0 0.0
    %1896 = vmatprep.subr.mxu0 0.0
    %1897 = vmatpush2.msra.mxu0 0.0
    %1898 = vmatprep.subr.mxu0 0.0
    %1899 = vmatpush2.msra.mxu0 0.0
    %1900 = vmatprep.subr.mxu0 0.0
    %1901 = vmatpush2.msra.mxu0 0.0
    %1902 = vmatprep.subr.mxu0 0.0
    %1903 = vmatpush2.msra.mxu0 0.0
    %1904 = vmatprep.subr.mxu0 0.0
    %1905 = vmatpush2.msra.mxu0 0.0
    %1906 = vmatprep.subr.mxu0 0.0
    %1907 = vmatpush2.msra.mxu0 0.0
    %1908 = vmatprep.subr.mxu0 0.0
    %1909 = vmatpush2.msra.mxu0 0.0
    %1910 = vmatprep.subr.mxu0 0.0
    %1911 = vmatpush2.msra.mxu0 0.0
    %1912 = vmatprep.subr.mxu0 0.0
    %1913 = vmatpush2.msra.mxu0 0.0
    %1914 = vmatprep.mubr.f32.mxu0 0.0
    %1915 = vmatmul.mubr.f32.gmra.mxu0 %v1832
    %v1916 = vpop.f32.mrf.mxu0
    %v1917 = vadd.f32 0.0, %v1916
    %v1918 = vpop.f32.mrf.mxu0
    %v1919 = vadd.f32 0.0, %v1918
    %1920 = vmatprep.mubr.f32.mxu0 0.0
    %1921 = vmatmul.mubr.f32.gmra.mxu0 %v1835
    %v1922 = vpop.f32.mrf.mxu0
    %v1923 = vadd.f32 0.0, %v1922
    %v1924 = vpop.f32.mrf.mxu0
    %v1925 = vadd.f32 0.0, %v1924
    %1926 = vmatprep.mubr.f32.mxu0 0.0
    %1927 = vmatmul.mubr.f32.gmra.mxu0 %v1838
    %v1928 = vpop.f32.mrf.mxu0
    %v1929 = vadd.f32 0.0, %v1928
    %v1930 = vpop.f32.mrf.mxu0
    %v1931 = vadd.f32 0.0, %v1930
    %1932 = vmatprep.mubr.f32.mxu0 0.0
    %1933 = vmatmul.mubr.f32.gmra.mxu0 %v1841
    %v1934 = vpop.f32.mrf.mxu0
    %v1935 = vadd.f32 0.0, %v1934
    %v1936 = vpop.f32.mrf.mxu0
    %v1937 = vadd.f32 0.0, %v1936
    %1938 = vdwg.mxu0
    %v1939 = vmul.f32 %v1390, %v1917
    %v1940 = vmul.f32 %v1391, %v1919
    %v1941 = vmul.f32 %v1392, %v1923
    %v1942 = vmul.f32 %v1393, %v1925
    %v1943 = vmul.f32 %v1394, %v1929
    %v1944 = vmul.f32 %v1395, %v1931
    %v1945 = vmul.f32 %v1396, %v1935
    %v1946 = vmul.f32 %v1397, %v1937
    %v1947 = vld [vmem:[#allocation15] sm:$0xff]
    %v1948 = vld [vmem:[#allocation15 + $0x8] sm:$0xff]
    %v1949 = vld [vmem:[#allocation15 + $0x10] sm:$0xff]
    %v1950 = vld [vmem:[#allocation15 + $0x18] sm:$0xff]
    %v1951 = vld [vmem:[#allocation15 + $0x20] sm:$0xff]
    %v1952 = vld [vmem:[#allocation15 + $0x28] sm:$0xff]
    %v1953 = vld [vmem:[#allocation15 + $0x30] sm:$0xff]
    %v1954 = vld [vmem:[#allocation15 + $0x38] sm:$0xff]
    %v1955 = vld [vmem:[#allocation15 + $0x40] sm:$0xff]
    %v1956 = vld [vmem:[#allocation15 + $0x48] sm:$0xff]
    %v1957 = vld [vmem:[#allocation15 + $0x50] sm:$0xff]
    %v1958 = vld [vmem:[#allocation15 + $0x58] sm:$0xff]
    %v1959 = vld [vmem:[#allocation15 + $0x60] sm:$0xff]
    %v1960 = vld [vmem:[#allocation15 + $0x68] sm:$0xff]
    %v1961 = vld [vmem:[#allocation15 + $0x70] sm:$0xff]
    %v1962 = vld [vmem:[#allocation15 + $0x78] sm:$0xff]
    %v1963 = vld [vmem:[#allocation15 + $0x80] sm:$0xff]
    %v1964 = vld [vmem:[#allocation15 + $0x88] sm:$0xff]
    %v1965 = vld [vmem:[#allocation15 + $0x90] sm:$0xff]
    %v1966 = vld [vmem:[#allocation15 + $0x98] sm:$0xff]
    %v1967 = vld [vmem:[#allocation15 + $0xa0] sm:$0xff]
    %v1968 = vld [vmem:[#allocation15 + $0xa8] sm:$0xff]
    %v1969 = vld [vmem:[#allocation15 + $0xb0] sm:$0xff]
    %v1970 = vld [vmem:[#allocation15 + $0xb8] sm:$0xff]
    %v1971 = vld [vmem:[#allocation15 + $0xc0] sm:$0xff]
    %v1972 = vld [vmem:[#allocation15 + $0xc8] sm:$0xff]
    %v1973 = vld [vmem:[#allocation15 + $0xd0] sm:$0xff]
    %v1974 = vld [vmem:[#allocation15 + $0xd8] sm:$0xff]
    %v1975 = vld [vmem:[#allocation15 + $0xe0] sm:$0xff]
    %v1976 = vld [vmem:[#allocation15 + $0xe8] sm:$0xff]
    %v1977 = vld [vmem:[#allocation15 + $0xf0] sm:$0xff]
    %v1978 = vld [vmem:[#allocation15 + $0xf8] sm:$0xff]
    %v1979 = vld [vmem:[%s16] sm:$0x1]
    %v1981 = vlaneseq
    %v1982 = vshrl.u32 %v1981, 7
    %v1983 = vsub.s32 0, %v1982
    %v1984 = vrot.slane %v1979, %v1983
    %1986 = vmatprep.subr.mxu0 0.0
    %1987 = vmatpush1.msra.mxu0 %v1962
    %1988 = vmatprep.subr.mxu0 0.0
    %1989 = vmatpush1.msra.mxu0 %v1961
    %1990 = vmatprep.subr.mxu0 0.0
    %1991 = vmatpush1.msra.mxu0 %v1960
    %1992 = vmatprep.subr.mxu0 0.0
    %1993 = vmatpush1.msra.mxu0 %v1959
    %1994 = vmatprep.subr.mxu0 0.0
    %1995 = vmatpush1.msra.mxu0 %v1958
    %1996 = vmatprep.subr.mxu0 0.0
    %1997 = vmatpush1.msra.mxu0 %v1957
    %1998 = vmatprep.subr.mxu0 0.0
    %1999 = vmatpush1.msra.mxu0 %v1956
    %2000 = vmatprep.subr.mxu0 0.0
    %2001 = vmatpush1.msra.mxu0 %v1955
    %2002 = vmatprep.subr.mxu0 0.0
    %2003 = vmatpush1.msra.mxu0 %v1954
    %2004 = vmatprep.subr.mxu0 0.0
    %2005 = vmatpush1.msra.mxu0 %v1953
    %2006 = vmatprep.subr.mxu0 0.0
    %2007 = vmatpush1.msra.mxu0 %v1952
    %2008 = vmatprep.subr.mxu0 0.0
    %2009 = vmatpush1.msra.mxu0 %v1951
    %2010 = vmatprep.subr.mxu0 0.0
    %2011 = vmatpush1.msra.mxu0 %v1950
    %2012 = vmatprep.subr.mxu0 0.0
    %2013 = vmatpush1.msra.mxu0 %v1949
    %2014 = vmatprep.subr.mxu0 0.0
    %2015 = vmatpush1.msra.mxu0 %v1948
    %2016 = vmatprep.subr.mxu0 0.0
    %2017 = vmatpush1.msra.mxu0 %v1947
    %2018 = vmatprep.subr.mxu0 0.0
    %2019 = vmatpush2.msra.mxu0 %v1978
    %2020 = vmatprep.subr.mxu0 0.0
    %2021 = vmatpush2.msra.mxu0 %v1977
    %2022 = vmatprep.subr.mxu0 0.0
    %2023 = vmatpush2.msra.mxu0 %v1976
    %2024 = vmatprep.subr.mxu0 0.0
    %2025 = vmatpush2.msra.mxu0 %v1975
    %2026 = vmatprep.subr.mxu0 0.0
    %2027 = vmatpush2.msra.mxu0 %v1974
    %2028 = vmatprep.subr.mxu0 0.0
    %2029 = vmatpush2.msra.mxu0 %v1973
    %2030 = vmatprep.subr.mxu0 0.0
    %2031 = vmatpush2.msra.mxu0 %v1972
    %2032 = vmatprep.subr.mxu0 0.0
    %2033 = vmatpush2.msra.mxu0 %v1971
    %2034 = vmatprep.subr.mxu0 0.0
    %2035 = vmatpush2.msra.mxu0 %v1970
    %2036 = vmatprep.subr.mxu0 0.0
    %2037 = vmatpush2.msra.mxu0 %v1969
    %2038 = vmatprep.subr.mxu0 0.0
    %2039 = vmatpush2.msra.mxu0 %v1968
    %2040 = vmatprep.subr.mxu0 0.0
    %2041 = vmatpush2.msra.mxu0 %v1967
    %2042 = vmatprep.subr.mxu0 0.0
    %2043 = vmatpush2.msra.mxu0 %v1966
    %2044 = vmatprep.subr.mxu0 0.0
    %2045 = vmatpush2.msra.mxu0 %v1965
    %2046 = vmatprep.subr.mxu0 0.0
    %2047 = vmatpush2.msra.mxu0 %v1964
    %2048 = vmatprep.subr.mxu0 0.0
    %2049 = vmatpush2.msra.mxu0 %v1963
    %2050 = vmatprep.mubr.f32.mxu0 %v1940
    %2051 = vmatmul.mubr.f32.gmra.mxu0 %v1939
    %v2052 = vpop.f32.mrf.mxu0
    %v2053 = vadd.f32 %v1984, %v2052
    %v2054 = vpop.f32.mrf.mxu0
    %2055 = vmatprep.mubr.f32.mxu0 %v1942
    %2056 = vmatmul.mubr.f32.gmra.mxu0 %v1941
    %v2057 = vpop.f32.mrf.mxu0
    %v2058 = vadd.f32 %v1984, %v2057
    %v2059 = vpop.f32.mrf.mxu0
    %2060 = vmatprep.mubr.f32.mxu0 %v1944
    %2061 = vmatmul.mubr.f32.gmra.mxu0 %v1943
    %v2062 = vpop.f32.mrf.mxu0
    %v2063 = vadd.f32 %v1984, %v2062
    %v2064 = vpop.f32.mrf.mxu0
    %2065 = vmatprep.mubr.f32.mxu0 %v1946
    %2066 = vmatmul.mubr.f32.gmra.mxu0 %v1945
    %v2067 = vpop.f32.mrf.mxu0
    %v2068 = vadd.f32 %v1984, %v2067
    %v2069 = vpop.f32.mrf.mxu0
    %2070 = vdwg.mxu0
    %v2071 = vld [vmem:[%s0] sm:$0xff]
    %v2072 = vld [vmem:[%s0 + $0x8] sm:$0xff]
    %v2073 = vld [vmem:[%s0 + $0x10] sm:$0xff]
    %v2074 = vld [vmem:[%s0 + $0x18] sm:$0xff]
    %v2075 = vadd.f32 %v2053, %v2071
    %v2076 = vadd.f32 %v2058, %v2072
    %v2077 = vadd.f32 %v2063, %v2073
    %v2078 = vadd.f32 %v2068, %v2074
    %2079 = vst [vmem:[#allocation17] sm:$0xff] %v2075
    %2080 = vst [vmem:[#allocation17 + $0x8] sm:$0xff] %v2076
    %2081 = vst [vmem:[#allocation17 + $0x10] sm:$0xff] %v2077
    %2082 = vst [vmem:[#allocation17 + $0x18] sm:$0xff] %v2078
    // Predicated region
    $region102: #{tpu_custom_call.1} parent=1 // pred_check
      _
    $region103: #{tpu_custom_call.1} parent=1 // pred_check_branch
      %2084 = sbr.rel (0) target = $region105
    $region104: #{tpu_custom_call.1} parent=1 // pred_region
      %s2086 = ssub.s32 512, 512
      %2087 = vsyncadd [#allocation5], %s2086
      %s2088 = sshll.u32 [#allocation17], 4
      %s2089 = int_to_ptr.vmem [resolvable:$true] %s2088
      %2094 = dma.vmem_to_hbm [thread:$0]  %s2089, 512, %s17, [#allocation5], 128, 128, 8
    $region105: #{tpu_custom_call.1} parent=1 // pred_fallthru
      _
    // Predicated region
    $region106: #{tpu_custom_call.1} parent=1 // pred_check
      _
    $region107: #{tpu_custom_call.1} parent=1 // pred_check_branch
      %2096 = sbr.rel (0) target = $region109
    $region108: #{tpu_custom_call.1} parent=1 // pred_region
      %2097 = dma.done [#allocation5], 512
    $region109: #{tpu_custom_call.1} parent=1 // pred_fallthru
      _
    %2098 = vsyncpa [#allocation4], 1
    %2099 = vsyncpa [#allocation7], 1
    %2100 = vsyncpa [#allocation10], 1
    %2101 = vsyncpa [#allocation13], 1
    %2102 = vsyncpa [#allocation16], 1
    %2103 = vsyncpa [#allocation5], 1

</llo_original>
